<compile_context>
chip_gen: v7x
topology: tpu7x:2x2x1
jax: 0.10.0
libtpu: 0.0.40
codegen_flags: <defaults>
</compile_context>

<pallas_src>
import jax
import jax.numpy as jnp
import numpy as np
from jax.experimental import pallas as pl
from jax.experimental.pallas import tpu as pltpu


# ----------------------------------------------------------------------------
# Fused Pallas kernel: grid = (node_tiles, levels); per-tile state in VMEM.
# ----------------------------------------------------------------------------
def _fused_tree_lstm_kernel(
    xw_ref,       # [NT, 4H]          f32   x @ W_all + b (gate order i|o|u|f)
    sel_ref,      # [MAX_CH, NT, NT]  bf16  one-hot child selectors (-1 -> zero row)
    u_iou_ref,    # [H, 3H]           bf16  fused U for gates (i | o | u)
    u_f_ref,      # [H, H]            bf16  U for forget gate
    hc_out_ref,   # [NT, 2H]          f32   output (h | c) slab for this (tile, level)
    h_prev_ref,   # [NT, H]           bf16  scratch: previous level's h (this tile)
    c_prev_ref,   # [NT, H]           f32   scratch: previous level's c (this tile)
):
    hidden = u_f_ref.shape[0]
    max_ch = sel_ref.shape[0]
    nt = xw_ref.shape[0]

    # First level step for this tile == deepest level: no previous states exist.
    @pl.when(pl.program_id(1) == 0)
    def _():
        h_prev_ref[...] = jnp.zeros_like(h_prev_ref)
        c_prev_ref[...] = jnp.zeros_like(c_prev_ref)

    xw_f = xw_ref[:, 3 * hidden:]                  # [NT, H]  f32
    h_prev = h_prev_ref[...]                       # [NT, H]  bf16 (resident state)
    c_prev = c_prev_ref[...]                       # [NT, H]  f32  (resident state)

    # ---- per-child loop (unrolled): gather + forget gate + child-sum accum. --
    h_sum = jnp.zeros((nt, hidden), jnp.float32)
    fc_sum = jnp.zeros((nt, hidden), jnp.float32)
    for k in range(max_ch):
        sel_k = sel_ref[k]                         # [NT, NT] bf16 (exact 0/1)
        # h gather: single-pass bf16 x bf16 MXU matmul (exact row selection).
        h_k = jnp.dot(sel_k, h_prev, preferred_element_type=jnp.float32)
        # c gather stays f32 so cell-state precision is unchanged.
        c_k = jnp.dot(sel_k.astype(jnp.float32), c_prev,
                      preferred_element_type=jnp.float32)
        # Per-child forget gate.
        f_k = jax.nn.sigmoid(
            xw_f + jnp.dot(h_k.astype(jnp.bfloat16), u_f_ref[...],
                           preferred_element_type=jnp.float32))
        h_sum = h_sum + h_k
        fc_sum = fc_sum + f_k * c_k                # padded child slots contribute 0

    # ---- fused i / o / u gates. ----------------------------------------------
    g = xw_ref[:, :3 * hidden] + jnp.dot(
        h_sum.astype(jnp.bfloat16), u_iou_ref[...],
        preferred_element_type=jnp.float32)        # [NT, 3H]
    i_g = jax.nn.sigmoid(g[:, :hidden])
    o_g = jax.nn.sigmoid(g[:, hidden:2 * hidden])
    u_g = jnp.tanh(g[:, 2 * hidden:])

    c_new = i_g * u_g + fc_sum
    h_new = o_g * jnp.tanh(c_new)

    # Direct lane-range stores (offsets 0 and H are multiples of 128 lanes).
    hc_out_ref[:, :hidden] = h_new
    hc_out_ref[:, hidden:] = c_new
    h_prev_ref[...] = h_new.astype(jnp.bfloat16)   # recurrent h carried in bf16
    c_prev_ref[...] = c_new                        # recurrent c carried in f32


# ----------------------------------------------------------------------------
# Wrapper: hoisted projection + precomputed selectors + one pallas_call.
# ----------------------------------------------------------------------------
@jax.jit
def _forward_stacked(x_stack, ix_stack, w_all, b_all, u_iou, u_f):
    levels, tiles, nt, _ = x_stack.shape
    max_ch = ix_stack.shape[3]
    hidden = u_f.shape[0]
    h2 = 2 * hidden

    # (1) Input projection has no dependence on the recurrent state -> compute
    #     it for ALL (level, tile) blocks as one big matmul off the sequential
    #     level chain and stream [NT, 4H] slabs into the kernel.
    xw_stack = jnp.einsum("lpnd,dh->lpnh", x_stack, w_all,
                          preferred_element_type=jnp.float32) + b_all  # f32

    # (2) One-hot child selectors precomputed outside the kernel (bf16, exact
    #     0/1; index -1 produces an all-zero row, i.e. free masking).
    sel_stack = jnp.transpose(
        jax.nn.one_hot(ix_stack, nt, dtype=jnp.bfloat16),   # [L,P,NT,C,NT]
        (0, 1, 3, 2, 4))                                    # [L,P,C,NT,NT]

    return pl.pallas_call(
        _fused_tree_lstm_kernel,
        out_shape=jax.ShapeDtypeStruct((levels, tiles, nt, h2), jnp.float32),
        grid=(tiles, levels),
        in_specs=[
            pl.BlockSpec((None, None, nt, 4 * hidden), lambda p, s: (s, p, 0, 0)),
            pl.BlockSpec((None, None, max_ch, nt, nt), lambda p, s: (s, p, 0, 0, 0)),
            # Weights: constant index maps -> DMA'd once, stay resident.
            pl.BlockSpec((hidden, 3 * hidden), lambda p, s: (0, 0)),
            pl.BlockSpec((hidden, hidden), lambda p, s: (0, 0)),
        ],
        out_specs=pl.BlockSpec((None, None, nt, h2), lambda p, s: (s, p, 0, 0)),
        scratch_shapes=[pltpu.VMEM((nt, hidden), jnp.bfloat16),   # h state (bf16)
                        pltpu.VMEM((nt, hidden), jnp.float32)],   # c state (f32)
        compiler_params=pltpu.CompilerParams(
            # Outer tile axis is independent work (v7x megacore); inner level
            # axis carries state through the scratch -> must stay sequential.
            dimension_semantics=("parallel", "arbitrary"),
            vmem_limit_bytes=32 * 1024 * 1024),
    )(xw_stack, sel_stack, u_iou, u_f)


def child_sum_tree_lstm_forward(forest, inputs, fused, hidden_size):
    """Mirrors ChildSumTreeLSTM.forward (deepest level -> root).

    inputs[l]:            [tiles, NT, D]       bf16
    forest["child_ixs"][l]: [tiles, NT, MAX_CH] int32 tile-local indices into
                            level l+1 (-1 == no child / padding).
    Returns {level: (h, c)} with h, c flattened to [tiles*NT, H].
    """
    max_level = forest["max_level"]
    order = list(range(max_level, -1, -1))        # reversed(range(max_level+1))
    x_stack = jnp.stack([inputs[l] for l in order], axis=0)
    ix_stack = jnp.stack([forest["child_ixs"][l] for l in order], axis=0)
    _, tiles, nt, d = x_stack.shape
    for l in order:  # layout contract (see module docstring)
        assert inputs[l].shape == (tiles, nt, d)
        assert forest["child_ixs"][l].shape[:2] == (tiles, nt)

    hc = _forward_stacked(x_stack, ix_stack, fused["w_all"], fused["b_all"],
                          fused["u_iou"], fused["u_f"])
    outputs = {}
    for s, l in enumerate(order):
        flat = hc[s].reshape(tiles * nt, 2 * hidden_size)
        outputs[l] = (flat[:, :hidden_size], flat[:, hidden_size:])
    return outputs


# ----------------------------------------------------------------------------
# Parameters (per-gate, like ChildSumTreeLSTMCell) + fusion into matmul slabs.
# ----------------------------------------------------------------------------
def init_params(key, input_size, hidden_size):
    names_w = ["w_i", "w_o", "w_u", "w_f"]
    names_u = ["u_i", "u_o", "u_u", "u_f"]
    names_b = ["b_i", "b_o", "b_u", "b_f"]
    keys = jax.random.split(key, 12)
    params = {}
    for nm, k in zip(names_w, keys[:4]):
        params[nm] = (0.1 * jax.random.normal(k, (input_size, hidden_size))
                      ).astype(jnp.float32)
    for nm, k in zip(names_u, keys[4:8]):
        params[nm] = (0.1 * jax.random.normal(k, (hidden_size, hidden_size))
                      ).astype(jnp.float32)
    for nm, k in zip(names_b, keys[8:]):
        params[nm] = (0.05 * jax.random.normal(k, (1, hidden_size))
                      ).astype(jnp.float32)
    return params


def fuse_params(params, matmul_dtype=jnp.bfloat16):
    """Concatenate per-gate weights into lane-dense fused operands (bf16)."""
    return {
        "w_all": jnp.concatenate(
            [params["w_i"], params["w_o"], params["w_u"], params["w_f"]],
            axis=1).astype(matmul_dtype),                       # [D, 4H]
        "b_all": jnp.concatenate(
            [params["b_i"], params["b_o"], params["b_u"], params["b_f"]],
            axis=1).astype(jnp.float32),                        # [1, 4H]
        "u_iou": jnp.concatenate(
            [params["u_i"], params["u_o"], params["u_u"]],
            axis=1).astype(matmul_dtype),                       # [H, 3H]
        "u_f": params["u_f"].astype(matmul_dtype),              # [H, H]
    }


# ----------------------------------------------------------------------------
# Pure-JAX reference with the SAME precision policy (h carried in bf16, c f32).
# ----------------------------------------------------------------------------
def _forward_ref(x_levels, ix_levels, fused, hidden, max_level):
    n_total = x_levels[max_level].shape[0]
    h_carry = jnp.zeros((n_total, hidden), jnp.bfloat16)
    c_carry = jnp.zeros((n_total, hidden), jnp.float32)
    outputs = {}
    for l in reversed(range(max_level + 1)):
        x = x_levels[l]
        ix = ix_levels[l]
        xw = jnp.dot(x, fused["w_all"],
                     preferred_element_type=jnp.float32) + fused["b_all"]
        xw_iou = xw[:, :3 * hidden]
        xw_f = xw[:, 3 * hidden:]
        mask = ix >= 0
        safe = jnp.where(mask, ix, 0)
        ch_h = jnp.where(mask[..., None],
                         jnp.take(h_carry, safe, axis=0), 0).astype(jnp.float32)
        ch_c = jnp.where(mask[..., None], jnp.take(c_carry, safe, axis=0), 0.0)
        h_sum = ch_h.sum(axis=1)
        f = jax.nn.sigmoid(
            xw_f[:, None, :] + jnp.einsum(
                "nch,hk->nck", ch_h.astype(jnp.bfloat16), fused["u_f"],
                preferred_element_type=jnp.float32))
        fc_sum = (f * ch_c).sum(axis=1)
        g = xw_iou + jnp.dot(h_sum.astype(jnp.bfloat16), fused["u_iou"],
                             preferred_element_type=jnp.float32)
        i_g = jax.nn.sigmoid(g[:, :hidden])
        o_g = jax.nn.sigmoid(g[:, hidden:2 * hidden])
        u_g = jnp.tanh(g[:, 2 * hidden:])
        c_new = i_g * u_g + fc_sum
        h_new = o_g * jnp.tanh(c_new)
        outputs[l] = (h_new, c_new)
        h_carry = h_new.astype(jnp.bfloat16)
        c_carry = c_new
    return outputs


if __name__ == "__main__":
    INPUT_SIZE = 64
    HIDDEN_SIZE = 128        # 2H = 256 -> lane-dense output slab
    MAX_CHILDREN = 2
    NODE_TILES = 2           # parallel tile axis (feeds v7x's 2nd TensorCore)
    N_TILE = 128             # nodes per tile per level (MXU/sublane friendly)
    TREES_PER_TILE = 32      # complete binary trees: 1 root, 2 internal, 4 leaves
    MAX_LEVEL = 2

    key = jax.random.PRNGKey(0)
    k_param, k_in = jax.random.split(key)
    params = init_params(k_param, INPUT_SIZE, HIDDEN_SIZE)
    fused = fuse_params(params)

    # Forest wiring, tile-local indices (-1 == "no child" / padding).
    ix2 = np.full((NODE_TILES, N_TILE, MAX_CHILDREN), -1, np.int32)  # leaves
    ix1 = np.full((NODE_TILES, N_TILE, MAX_CHILDREN), -1, np.int32)
    ix0 = np.full((NODE_TILES, N_TILE, MAX_CHILDREN), -1, np.int32)
    for p in range(NODE_TILES):
        for j in range(TREES_PER_TILE):
            for i in range(2):                       # level-1 internal nodes
                ix1[p, 2 * j + i] = [4 * j + 2 * i, 4 * j + 2 * i + 1]
            ix0[p, j] = [2 * j, 2 * j + 1]           # roots
    forest = {
        "max_level": MAX_LEVEL,
        "child_ixs": {0: jnp.asarray(ix0), 1: jnp.asarray(ix1), 2: jnp.asarray(ix2)},
    }

    in_keys = jax.random.split(k_in, MAX_LEVEL + 1)
    inputs = {
        l: jax.random.normal(
            in_keys[l], (NODE_TILES, N_TILE, INPUT_SIZE)).astype(jnp.bfloat16)
        for l in range(MAX_LEVEL + 1)
    }

    outputs = child_sum_tree_lstm_forward(forest, inputs, fused, HIDDEN_SIZE)
    for l in outputs:
        for arr in outputs[l]:
            jax.block_until_ready(arr)

    # ---- correctness check against the pure-JAX reference (global layout). --
    def to_global_ix(ix_tiled):
        g = np.asarray(ix_tiled).copy()
        for p in range(NODE_TILES):
            m = g[p] >= 0
            g[p][m] += p * N_TILE
        return jnp.asarray(g.reshape(NODE_TILES * N_TILE, MAX_CHILDREN))

    x_g = {l: inputs[l].reshape(NODE_TILES * N_TILE, INPUT_SIZE) for l in inputs}
    ix_g = {l: to_global_ix(forest["child_ixs"][l]) for l in forest["child_ixs"]}
    ref_outputs = _forward_ref(x_g, ix_g, fused, HIDDEN_SIZE, MAX_LEVEL)

    for l in range(MAX_LEVEL + 1):
        for got, want in zip(outputs[l], ref_outputs[l]):
            np.testing.assert_allclose(np.asarray(got), np.asarray(want),
                                       rtol=2e-3, atol=2e-3)

    print("KERNEL_OK")
</pallas_src>

<mosaic_0001>
module attributes {stable_mosaic.version = 11 : i64} {
  func.func @_fused_tree_lstm_kernel(%arg0: i32, %arg1: i32, %arg2: memref<1x1x128x512xf32, #tpu.memory_space<vmem>>, %arg3: memref<1x1x2x128x128xbf16, #tpu.memory_space<vmem>>, %arg4: memref<128x384xbf16, #tpu.memory_space<vmem>>, %arg5: memref<128x128xbf16, #tpu.memory_space<vmem>>, %arg6: memref<1x1x128x256xf32, #tpu.memory_space<vmem>>, %arg7: memref<128x128xbf16, #tpu.memory_space<vmem>>, %arg8: memref<128x128xf32, #tpu.memory_space<vmem>>) attributes {dimension_semantics = [#tpu.dimension_semantics<parallel>, #tpu.dimension_semantics<arbitrary>], iteration_bounds = array<i64: 2, 3>, scalar_prefetch = 0 : i64, scratch_operands = 2 : i64, tpu.core_type = #tpu.core_type<tc>, window_params = [{transform_indices = @transform_0, window_bounds = array<i64: 1, 1, 128, 512>}, {transform_indices = @transform_1, window_bounds = array<i64: 1, 1, 2, 128, 128>}, {pipeline_mode = #tpu.pipeline_mode<synchronous>, transform_indices = @transform_2, window_bounds = array<i64: 128, 384>}, {pipeline_mode = #tpu.pipeline_mode<synchronous>, transform_indices = @transform_3, window_bounds = array<i64: 128, 128>}, {transform_indices = @transform_4, window_bounds = array<i64: 1, 1, 128, 256>}]} {
    %c0_i32 = arith.constant 0 : i32
    %0 = arith.cmpi eq, %arg1, %c0_i32 : i32
    %1 = arith.extui %0 : i1 to i32
    %c0_i32_0 = arith.constant 0 : i32
    %2 = arith.cmpi ne, %1, %c0_i32_0 : i32
    scf.if %2 {
      %cst_49 = arith.constant 0.000000e+00 : bf16
      %76 = vector.broadcast %cst_49 : bf16 to vector<128x128xbf16>
      %c0_50 = arith.constant 0 : index
      %c0_51 = arith.constant 0 : index
      %77 = vector.load %arg7[%c0_50, %c0_51] : memref<128x128xbf16, #tpu.memory_space<vmem>>, vector<128x128xbf16>
      tpu.vector_store %arg7[%c0_50, %c0_51], %76 {strides = array<i32>} : memref<128x128xbf16, #tpu.memory_space<vmem>>, vector<128x128xbf16>,
      %cst_52 = arith.constant 0.000000e+00 : f32
      %78 = vector.broadcast %cst_52 : f32 to vector<128x128xf32>
      %c0_53 = arith.constant 0 : index
      %c0_54 = arith.constant 0 : index
      %79 = vector.load %arg8[%c0_53, %c0_54] : memref<128x128xf32, #tpu.memory_space<vmem>>, vector<128x128xf32>
      tpu.vector_store %arg8[%c0_53, %c0_54], %78 {strides = array<i32>} : memref<128x128xf32, #tpu.memory_space<vmem>>, vector<128x128xf32>,
    } else {
    }
    %c0 = arith.constant 0 : index
    %c0_1 = arith.constant 0 : index
    %c0_2 = arith.constant 0 : index
    %c384 = arith.constant 384 : index
    %3 = vector.load %arg2[%c0, %c0_1, %c0_2, %c384] : memref<1x1x128x512xf32, #tpu.memory_space<vmem>>, vector<1x1x128x128xf32>
    %4 = vector.shape_cast %3 : vector<1x1x128x128xf32> to vector<128x128xf32>
    %c0_3 = arith.constant 0 : index
    %c0_4 = arith.constant 0 : index
    %5 = vector.load %arg7[%c0_3, %c0_4] : memref<128x128xbf16, #tpu.memory_space<vmem>>, vector<128x128xbf16>
    %c0_5 = arith.constant 0 : index
    %c0_6 = arith.constant 0 : index
    %6 = vector.load %arg8[%c0_5, %c0_6] : memref<128x128xf32, #tpu.memory_space<vmem>>, vector<128x128xf32>
    %cst = arith.constant 0.000000e+00 : f32
    %7 = vector.broadcast %cst : f32 to vector<128x128xf32>
    %cst_7 = arith.constant 0.000000e+00 : f32
    %8 = vector.broadcast %cst_7 : f32 to vector<128x128xf32>
    %c0_8 = arith.constant 0 : index
    %c0_9 = arith.constant 0 : index
    %c0_10 = arith.constant 0 : index
    %c0_11 = arith.constant 0 : index
    %c0_12 = arith.constant 0 : index
    %9 = vector.load %arg3[%c0_8, %c0_9, %c0_10, %c0_11, %c0_12] : memref<1x1x2x128x128xbf16, #tpu.memory_space<vmem>>, vector<1x1x1x128x128xbf16>
    %10 = vector.shape_cast %9 : vector<1x1x1x128x128xbf16> to vector<128x128xbf16>
    %cst_13 = arith.constant dense<0.000000e+00> : vector<128x128xf32>
    %11 = tpu.matmul %10, %5, %cst_13 {dimension_numbers = #tpu.dot_dimension_numbers<[1], [0], [0], [1], [0, 0, 1, 1], [], []>} : vector<128x128xbf16>, vector<128x128xbf16>, vector<128x128xf32> -> vector<128x128xf32>
    %12 = arith.extf %10 : vector<128x128xbf16> to vector<128x128xf32>
    %cst_14 = arith.constant dense<0.000000e+00> : vector<128x128xf32>
    %13 = tpu.matmul %12, %6, %cst_14 {dimension_numbers = #tpu.dot_dimension_numbers<[1], [0], [0], [1], [0, 0, 1, 1], [], []>} : vector<128x128xf32>, vector<128x128xf32>, vector<128x128xf32> -> vector<128x128xf32>
    %14 = arith.truncf %11 : vector<128x128xf32> to vector<128x128xbf16>
    %c0_15 = arith.constant 0 : index
    %c0_16 = arith.constant 0 : index
    %15 = vector.load %arg5[%c0_15, %c0_16] : memref<128x128xbf16, #tpu.memory_space<vmem>>, vector<128x128xbf16>
    %cst_17 = arith.constant dense<0.000000e+00> : vector<128x128xf32>
    %16 = tpu.matmul %14, %15, %cst_17 {dimension_numbers = #tpu.dot_dimension_numbers<[1], [0], [0], [1], [0, 0, 1, 1], [], []>} : vector<128x128xbf16>, vector<128x128xbf16>, vector<128x128xf32> -> vector<128x128xf32>
    %17 = arith.addf %4, %16 : vector<128x128xf32>
    %18 = arith.negf %17 : vector<128x128xf32>
    %19 = math.exp %18 : vector<128x128xf32>
    %cst_18 = arith.constant 1.000000e+00 : f32
    %20 = vector.broadcast %cst_18 : f32 to vector<128x128xf32>
    %21 = arith.addf %20, %19 : vector<128x128xf32>
    %22 = arith.divf %20, %21 : vector<128x128xf32>
    %23 = arith.addf %7, %11 : vector<128x128xf32>
    %24 = arith.mulf %22, %13 : vector<128x128xf32>
    %25 = arith.addf %8, %24 : vector<128x128xf32>
    %c0_19 = arith.constant 0 : index
    %c0_20 = arith.constant 0 : index
    %c1 = arith.constant 1 : index
    %c0_21 = arith.constant 0 : index
    %c0_22 = arith.constant 0 : index
    %26 = vector.load %arg3[%c0_19, %c0_20, %c1, %c0_21, %c0_22] : memref<1x1x2x128x128xbf16, #tpu.memory_space<vmem>>, vector<1x1x1x128x128xbf16>
    %27 = vector.shape_cast %26 : vector<1x1x1x128x128xbf16> to vector<128x128xbf16>
    %cst_23 = arith.constant dense<0.000000e+00> : vector<128x128xf32>
    %28 = tpu.matmul %27, %5, %cst_23 {dimension_numbers = #tpu.dot_dimension_numbers<[1], [0], [0], [1], [0, 0, 1, 1], [], []>} : vector<128x128xbf16>, vector<128x128xbf16>, vector<128x128xf32> -> vector<128x128xf32>
    %29 = arith.extf %27 : vector<128x128xbf16> to vector<128x128xf32>
    %cst_24 = arith.constant dense<0.000000e+00> : vector<128x128xf32>
    %30 = tpu.matmul %29, %6, %cst_24 {dimension_numbers = #tpu.dot_dimension_numbers<[1], [0], [0], [1], [0, 0, 1, 1], [], []>} : vector<128x128xf32>, vector<128x128xf32>, vector<128x128xf32> -> vector<128x128xf32>
    %31 = arith.truncf %28 : vector<128x128xf32> to vector<128x128xbf16>
    %c0_25 = arith.constant 0 : index
    %c0_26 = arith.constant 0 : index
    %32 = vector.load %arg5[%c0_25, %c0_26] : memref<128x128xbf16, #tpu.memory_space<vmem>>, vector<128x128xbf16>
    %cst_27 = arith.constant dense<0.000000e+00> : vector<128x128xf32>
    %33 = tpu.matmul %31, %32, %cst_27 {dimension_numbers = #tpu.dot_dimension_numbers<[1], [0], [0], [1], [0, 0, 1, 1], [], []>} : vector<128x128xbf16>, vector<128x128xbf16>, vector<128x128xf32> -> vector<128x128xf32>
    %34 = arith.addf %4, %33 : vector<128x128xf32>
    %35 = arith.negf %34 : vector<128x128xf32>
    %36 = math.exp %35 : vector<128x128xf32>
    %cst_28 = arith.constant 1.000000e+00 : f32
    %37 = vector.broadcast %cst_28 : f32 to vector<128x128xf32>
    %38 = arith.addf %37, %36 : vector<128x128xf32>
    %39 = arith.divf %37, %38 : vector<128x128xf32>
    %40 = arith.addf %23, %28 : vector<128x128xf32>
    %41 = arith.mulf %39, %30 : vector<128x128xf32>
    %42 = arith.addf %25, %41 : vector<128x128xf32>
    %c0_29 = arith.constant 0 : index
    %c0_30 = arith.constant 0 : index
    %c0_31 = arith.constant 0 : index
    %c0_32 = arith.constant 0 : index
    %43 = vector.load %arg2[%c0_29, %c0_30, %c0_31, %c0_32] : memref<1x1x128x512xf32, #tpu.memory_space<vmem>>, vector<1x1x128x384xf32>
    %44 = vector.shape_cast %43 : vector<1x1x128x384xf32> to vector<128x384xf32>
    %45 = arith.truncf %40 : vector<128x128xf32> to vector<128x128xbf16>
    %c0_33 = arith.constant 0 : index
    %c0_34 = arith.constant 0 : index
    %46 = vector.load %arg4[%c0_33, %c0_34] : memref<128x384xbf16, #tpu.memory_space<vmem>>, vector<128x384xbf16>
    %cst_35 = arith.constant dense<0.000000e+00> : vector<128x384xf32>
    %47 = tpu.matmul %45, %46, %cst_35 {dimension_numbers = #tpu.dot_dimension_numbers<[1], [0], [0], [1], [0, 0, 1, 1], [], []>} : vector<128x128xbf16>, vector<128x384xbf16>, vector<128x384xf32> -> vector<128x384xf32>
    %48 = arith.addf %44, %47 : vector<128x384xf32>
    %49 = vector.extract_strided_slice %48 {offsets = [0, 0], sizes = [128, 128], strides = [1, 1]} : vector<128x384xf32> to vector<128x128xf32>
    %50 = arith.negf %49 : vector<128x128xf32>
    %51 = math.exp %50 : vector<128x128xf32>
    %cst_36 = arith.constant 1.000000e+00 : f32
    %52 = vector.broadcast %cst_36 : f32 to vector<128x128xf32>
    %53 = arith.addf %52, %51 : vector<128x128xf32>
    %54 = arith.divf %52, %53 : vector<128x128xf32>
    %55 = vector.extract_strided_slice %48 {offsets = [0, 128], sizes = [128, 128], strides = [1, 1]} : vector<128x384xf32> to vector<128x128xf32>
    %56 = arith.negf %55 : vector<128x128xf32>
    %57 = math.exp %56 : vector<128x128xf32>
    %cst_37 = arith.constant 1.000000e+00 : f32
    %58 = vector.broadcast %cst_37 : f32 to vector<128x128xf32>
    %59 = arith.addf %58, %57 : vector<128x128xf32>
    %60 = arith.divf %58, %59 : vector<128x128xf32>
    %61 = vector.extract_strided_slice %48 {offsets = [0, 256], sizes = [128, 128], strides = [1, 1]} : vector<128x384xf32> to vector<128x128xf32>
    %62 = math.tanh %61 : vector<128x128xf32>
    %63 = arith.mulf %54, %62 : vector<128x128xf32>
    %64 = arith.addf %63, %42 : vector<128x128xf32>
    %65 = math.tanh %64 : vector<128x128xf32>
    %66 = arith.mulf %60, %65 : vector<128x128xf32>
    %c0_38 = arith.constant 0 : index
    %c0_39 = arith.constant 0 : index
    %c0_40 = arith.constant 0 : index
    %c0_41 = arith.constant 0 : index
    %67 = vector.load %arg6[%c0_38, %c0_39, %c0_40, %c0_41] : memref<1x1x128x256xf32, #tpu.memory_space<vmem>>, vector<1x1x128x128xf32>
    %68 = vector.shape_cast %67 : vector<1x1x128x128xf32> to vector<128x128xf32>
    %69 = vector.shape_cast %66 : vector<128x128xf32> to vector<1x1x128x128xf32>
    tpu.vector_store %arg6[%c0_38, %c0_39, %c0_40, %c0_41], %69 {strides = array<i32>} : memref<1x1x128x256xf32, #tpu.memory_space<vmem>>, vector<1x1x128x128xf32>,
    %c0_42 = arith.constant 0 : index
    %c0_43 = arith.constant 0 : index
    %c0_44 = arith.constant 0 : index
    %c128 = arith.constant 128 : index
    %70 = vector.load %arg6[%c0_42, %c0_43, %c0_44, %c128] : memref<1x1x128x256xf32, #tpu.memory_space<vmem>>, vector<1x1x128x128xf32>
    %71 = vector.shape_cast %70 : vector<1x1x128x128xf32> to vector<128x128xf32>
    %72 = vector.shape_cast %64 : vector<128x128xf32> to vector<1x1x128x128xf32>
    tpu.vector_store %arg6[%c0_42, %c0_43, %c0_44, %c128], %72 {strides = array<i32>} : memref<1x1x128x256xf32, #tpu.memory_space<vmem>>, vector<1x1x128x128xf32>,
    %73 = arith.truncf %66 : vector<128x128xf32> to vector<128x128xbf16>
    %c0_45 = arith.constant 0 : index
    %c0_46 = arith.constant 0 : index
    %74 = vector.load %arg7[%c0_45, %c0_46] : memref<128x128xbf16, #tpu.memory_space<vmem>>, vector<128x128xbf16>
    tpu.vector_store %arg7[%c0_45, %c0_46], %73 {strides = array<i32>} : memref<128x128xbf16, #tpu.memory_space<vmem>>, vector<128x128xbf16>,
    %c0_47 = arith.constant 0 : index
    %c0_48 = arith.constant 0 : index
    %75 = vector.load %arg8[%c0_47, %c0_48] : memref<128x128xf32, #tpu.memory_space<vmem>>, vector<128x128xf32>
    tpu.vector_store %arg8[%c0_47, %c0_48], %64 {strides = array<i32>} : memref<128x128xf32, #tpu.memory_space<vmem>>, vector<128x128xf32>,
    return
  }
  func.func @transform_0(%arg0: i32, %arg1: i32) -> (i32, i32, i32, i32) {
    %c0_i32 = arith.constant 0 : i32
    %c0_i32_0 = arith.constant 0 : i32
    %c0_i32_1 = arith.constant 0 : i32
    return %arg1, %arg0, %c0_i32, %c0_i32_0 : i32, i32, i32, i32
  }
  func.func @transform_1(%arg0: i32, %arg1: i32) -> (i32, i32, i32, i32, i32) {
    %c0_i32 = arith.constant 0 : i32
    %c0_i32_0 = arith.constant 0 : i32
    %c0_i32_1 = arith.constant 0 : i32
    %c0_i32_2 = arith.constant 0 : i32
    return %arg1, %arg0, %c0_i32, %c0_i32_0, %c0_i32_1 : i32, i32, i32, i32, i32
  }
  func.func @transform_2(%arg0: i32, %arg1: i32) -> (i32, i32) {
    %c0_i32 = arith.constant 0 : i32
    %c0_i32_0 = arith.constant 0 : i32
    %c0_i32_1 = arith.constant 0 : i32
    return %c0_i32, %c0_i32_0 : i32, i32
  }
  func.func @transform_3(%arg0: i32, %arg1: i32) -> (i32, i32) {
    %c0_i32 = arith.constant 0 : i32
    %c0_i32_0 = arith.constant 0 : i32
    %c0_i32_1 = arith.constant 0 : i32
    return %c0_i32, %c0_i32_0 : i32, i32
  }
  func.func @transform_4(%arg0: i32, %arg1: i32) -> (i32, i32, i32, i32) {
    %c0_i32 = arith.constant 0 : i32
    %c0_i32_0 = arith.constant 0 : i32
    %c0_i32_1 = arith.constant 0 : i32
    return %arg1, %arg0, %c0_i32, %c0_i32_0 : i32, i32, i32, i32
  }
}

</mosaic_0001>

<llo_original>
// kernel: _forward_stacked.1
$region0: #{_forward_stacked.1}
  #allocation0 [shape = 'u32[]', space=smem, size = 0x4, offset = 0x4, fixed_abs, tag = 'smem constant byte address 0x4 - core index']
  #allocation1 [shape = 'u32[144,128]{1,0:T(1,128)}', space=vmem, size = 0x12000, scoped, tag = 'internal scratch']
  #allocation2 [shape = 'bf16[128,128]{1,0:T(16,128)(2,1)}', space=vmem, size = 0x8000, scoped, tag = 'scratch operand']
  #allocation3 [shape = 'f32[128,128]{1,0:T(8,128)}', space=vmem, size = 0x10000, scoped, tag = 'scratch operand']
  %s0 = inlined_call_operand.vmem [shape: f32[3,2,128,512], index: 0, kind: input, shape index: {}]
  %s1 = inlined_call_operand.vmem [shape: bf16[3,2,2,128,128], index: 1, kind: input, shape index: {}]
  %s2 = inlined_call_operand.vmem [shape: bf16[128,384], index: 2, kind: input, shape index: {}]
  %s3 = inlined_call_operand.vmem [shape: bf16[128,128], index: 3, kind: input, shape index: {}]
  %s4 = inlined_call_operand.hbm [shape: f32[3,2,128,256], index: 4, kind: output, shape index: {}]
  %s5 = sld [smem:[#allocation0]]
  $region53: #{_forward_stacked.1} parent=0
    _
  %s7 = ssub.s32 1, %s5
  %s8 = scalar_select 0, %s7, %s5
  $region1: #{_forward_stacked.1} parent=0
    #allocation4 [shape = 'u8[262144]{0}', space=vmem, size = 0x40000, scoped, tag = 'output window, operand 0']
    #allocation5 [shape = 's32[2]{0}', space=sflag, size = 0x8, scoped, tag = 'scoped memory for _forward_stacked.1']
    %9 = vsyncpa [#allocation5], 0
    %s10 = scalar_lea.sflag [#allocation5], 1
    %11 = vsyncpa %s10, 0
    loop: start=0, step=1, limit=8
    $region2: #{_forward_stacked.1} parent=1 // loop_pre_header
      _
    $region3: #{_forward_stacked.1} parent=1 // loop_header
      %s13 = sphi 0, %s17
      %p14 = scmp.ge.s32.totalorder %s13, 8
      %s20 = sphi 0, %s32
      %s21 = sphi 0, %s28
      %s22 = sphi 0, %s20
      %s23 = sphi 0, %s21
      %s24 = sphi 0, %s22
      %s25 = sphi 0, %s23
      %s37 = sphi 0, %s39
      %s40 = sphi 0, %s37
      %s41 = sphi 0, %s40
      %s57 = sphi 0, %s41
      %s65 = sphi 0, %s67
      %s68 = sphi 0, %s65
      %s69 = sphi 0, %s68
      %s85 = sphi 0, %s69
      %s89 = sphi 0, %s89
      %s91 = sphi 0, %s89
      %s92 = sphi 0, %s91
      %s106 = sphi 0, %s92
      %s110 = sphi 0, %s110
      %s112 = sphi 0, %s110
      %s113 = sphi 0, %s112
      %s127 = sphi 0, %s113
      %s135 = sphi 0, %s137
      %s138 = sphi 0, %s135
      %s139 = sphi 0, %s138
      %s155 = sphi 0, %s139
    $region4: #{_forward_stacked.1} parent=1 // loop_header_branch
      %16 = sbr.rel (%p14) target = $region8
    $region5: #{_forward_stacked.1} parent=1 // loop_body
      %s18 = ssub.s32 %s13, 1
      %s19 = ssub.s32 %s13, 2
      %s26 = sadd.s32 1, %s21
      %p27 = scmp.ge.s32.totalorder %s26, 3
      %s28 = scalar_select %p27, 0, %s26
      %s29 = sadd.s32 1, %s20
      %s30 = scalar_select %p27, %s29, %s20
      %p31 = scmp.ge.s32.totalorder %s30, 2
      %s32 = scalar_select %p31, 0, %s30
      %s33 = ssub.s32 %s21, %s28
      %s34 = ssub.s32 %s20, %s32
      %s35 = sor.u32 %s33, %s34
      %p36 = scmp.eq.s32.totalorder %s35, 0
      %s38 = sadd.s32 %s37, 1
      %s39 = scalar_select %p36, %s37, %s38
      %p42 = pneg %p36
      %p43 = scmp.eq.s32.totalorder %s13, 5
      %p44 = por %p42, %p43
      %p45 = scmp.ne.s32.totalorder %s37, %s40
      %p46 = scmp.eq.s32.totalorder %s13, 0
      %p47 = por %p45, %p46
      %p48 = scmp.ne.s32.totalorder %s37, %s40
      %p49 = scmp.eq.s32.totalorder %s18, 5
      %p50 = por %p48, %p49
      %p51 = scmp.ne.s32.totalorder %s40, %s41
      %p52 = scmp.eq.s32.totalorder %s18, 0
      %p53 = por %p51, %p52
      %p54 = scmp.ne.s32.totalorder %s40, %s41
      %p55 = scmp.eq.s32.totalorder %s19, 5
      %p56 = por %p54, %p55
      %p58 = scmp.ne.s32.totalorder %s41, %s57
      %p59 = scmp.eq.s32.totalorder %s19, 0
      %p60 = por %p58, %p59
      %s61 = ssub.s32 %s21, %s28
      %s62 = ssub.s32 %s20, %s32
      %s63 = sor.u32 %s61, %s62
      %p64 = scmp.eq.s32.totalorder %s63, 0
      %s66 = sadd.s32 %s65, 1
      %s67 = scalar_select %p64, %s65, %s66
      %p70 = pneg %p64
      %p71 = scmp.eq.s32.totalorder %s13, 5
      %p72 = por %p70, %p71
      %p73 = scmp.ne.s32.totalorder %s65, %s68
      %p74 = scmp.eq.s32.totalorder %s13, 0
      %p75 = por %p73, %p74
      %p76 = scmp.ne.s32.totalorder %s65, %s68
      %p77 = scmp.eq.s32.totalorder %s18, 5
      %p78 = por %p76, %p77
      %p79 = scmp.ne.s32.totalorder %s68, %s69
      %p80 = scmp.eq.s32.totalorder %s18, 0
      %p81 = por %p79, %p80
      %p82 = scmp.ne.s32.totalorder %s68, %s69
      %p83 = scmp.eq.s32.totalorder %s19, 5
      %p84 = por %p82, %p83
      %p86 = scmp.ne.s32.totalorder %s69, %s85
      %p87 = scmp.eq.s32.totalorder %s19, 0
      %p88 = por %p86, %p87
      %s90 = sadd.s32 %s89, 1
      %p93 = scmp.eq.s32.totalorder %s13, 5
      %p94 = scmp.ne.s32.totalorder %s89, %s91
      %p95 = scmp.eq.s32.totalorder %s13, 0
      %p96 = por %p94, %p95
      %p97 = scmp.ne.s32.totalorder %s89, %s91
      %p98 = scmp.eq.s32.totalorder %s18, 5
      %p99 = por %p97, %p98
      %p100 = scmp.ne.s32.totalorder %s91, %s92
      %p101 = scmp.eq.s32.totalorder %s18, 0
      %p102 = por %p100, %p101
      %p103 = scmp.ne.s32.totalorder %s91, %s92
      %p104 = scmp.eq.s32.totalorder %s19, 5
      %p105 = por %p103, %p104
      %p107 = scmp.ne.s32.totalorder %s92, %s106
      %p108 = scmp.eq.s32.totalorder %s19, 0
      %p109 = por %p107, %p108
      %s111 = sadd.s32 %s110, 1
      %p114 = scmp.eq.s32.totalorder %s13, 5
      %p115 = scmp.ne.s32.totalorder %s110, %s112
      %p116 = scmp.eq.s32.totalorder %s13, 0
      %p117 = por %p115, %p116
      %p118 = scmp.ne.s32.totalorder %s110, %s112
      %p119 = scmp.eq.s32.totalorder %s18, 5
      %p120 = por %p118, %p119
      %p121 = scmp.ne.s32.totalorder %s112, %s113
      %p122 = scmp.eq.s32.totalorder %s18, 0
      %p123 = por %p121, %p122
      %p124 = scmp.ne.s32.totalorder %s112, %s113
      %p125 = scmp.eq.s32.totalorder %s19, 5
      %p126 = por %p124, %p125
      %p128 = scmp.ne.s32.totalorder %s113, %s127
      %p129 = scmp.eq.s32.totalorder %s19, 0
      %p130 = por %p128, %p129
      %s131 = ssub.s32 %s21, %s28
      %s132 = ssub.s32 %s20, %s32
      %s133 = sor.u32 %s131, %s132
      %p134 = scmp.eq.s32.totalorder %s133, 0
      %s136 = sadd.s32 %s135, 1
      %s137 = scalar_select %p134, %s135, %s136
      %p140 = pneg %p134
      %p141 = scmp.eq.s32.totalorder %s13, 5
      %p142 = por %p140, %p141
      %p143 = scmp.ne.s32.totalorder %s135, %s138
      %p144 = scmp.eq.s32.totalorder %s13, 0
      %p145 = por %p143, %p144
      %p146 = scmp.ne.s32.totalorder %s135, %s138
      %p147 = scmp.eq.s32.totalorder %s18, 5
      %p148 = por %p146, %p147
      %p149 = scmp.ne.s32.totalorder %s138, %s139
      %p150 = scmp.eq.s32.totalorder %s18, 0
      %p151 = por %p149, %p150
      %p152 = scmp.ne.s32.totalorder %s138, %s139
      %p153 = scmp.eq.s32.totalorder %s19, 5
      %p154 = por %p152, %p153
      %p156 = scmp.ne.s32.totalorder %s139, %s155
      %p157 = scmp.eq.s32.totalorder %s19, 0
      %p158 = por %p156, %p157
      %p159 = scmp.le.s32.totalorder 1, %s13
      %p160 = scmp.lt.s32.totalorder %s13, 7
      %p161 = pnand %p159, %p160
      %p162 = pneg %p161
      // Predicated region
      $region9: #{_forward_stacked.1} parent=5 // pred_check
        _
      $region10: #{_forward_stacked.1} parent=5 // pred_check_branch
        %164 = sbr.rel (%p161) target = $region12
      $region11: #{_forward_stacked.1} parent=5 // pred_region
        %s165 = ssub.s32 %s13, 1
        // Predicated region
        $region13: #{_forward_stacked.1} parent=11 // pred_check
          %p166 = pneg %p102
        $region14: #{_forward_stacked.1} parent=11 // pred_check_branch
          %168 = sbr.rel (%p166) target = $region16
        $region15: #{_forward_stacked.1} parent=11 // pred_region
          _
        $region16: #{_forward_stacked.1} parent=11 // pred_fallthru
          _
        // Predicated region
        $region17: #{_forward_stacked.1} parent=11 // pred_check
          %p169 = pneg %p123
        $region18: #{_forward_stacked.1} parent=11 // pred_check_branch
          %171 = sbr.rel (%p169) target = $region20
        $region19: #{_forward_stacked.1} parent=11 // pred_region
          _
        $region20: #{_forward_stacked.1} parent=11 // pred_fallthru
          _
      $region12: #{_forward_stacked.1} parent=5 // pred_fallthru
        _
      %p172 = scmp.lt.s32.totalorder %s13, 6
      // Predicated region
      $region21: #{_forward_stacked.1} parent=5 // pred_check
        %p173 = pneg %p172
      $region22: #{_forward_stacked.1} parent=5 // pred_check_branch
        %175 = sbr.rel (%p173) target = $region24
      $region23: #{_forward_stacked.1} parent=5 // pred_region
        // Predicated region
        $region25: #{_forward_stacked.1} parent=23 // pred_check
          %p176 = pneg %p47
        $region26: #{_forward_stacked.1} parent=23 // pred_check_branch
          %178 = sbr.rel (%p176) target = $region28
        $region27: #{_forward_stacked.1} parent=23 // pred_region
          %p179 = scmp.lt.s32.totalorder %s21, 2
          %s180 = scalar_select %p179, %s21, 2
          %p181 = scmp.lt.s32.totalorder %s20, 1
          %s182 = scalar_select %p181, %s20, 1
          %s183 = smul.addr %s182, 64
          %s184 = smul.addr %s180, 128
          %s185 = sadd.s32 %s183, %s184
          %s186 = smul.addr %s185, 8
          %s187 = scalar_lea.vmem %s0, %s186
        $region28: #{_forward_stacked.1} parent=23 // pred_fallthru
          _
        // Predicated region
        $region29: #{_forward_stacked.1} parent=23 // pred_check
          %p188 = pneg %p75
        $region30: #{_forward_stacked.1} parent=23 // pred_check_branch
          %190 = sbr.rel (%p188) target = $region32
        $region31: #{_forward_stacked.1} parent=23 // pred_region
          %p191 = scmp.lt.s32.totalorder %s21, 2
          %s192 = scalar_select %p191, %s21, 2
          %p193 = scmp.lt.s32.totalorder %s20, 1
          %s194 = scalar_select %p193, %s20, 1
          %s195 = smul.addr %s194, 32
          %s196 = smul.addr %s192, 64
          %s197 = sadd.s32 %s195, %s196
          %s198 = smul.addr %s197, 4
          %s199 = scalar_lea.vmem %s1, %s198
        $region32: #{_forward_stacked.1} parent=23 // pred_fallthru
          _
      $region24: #{_forward_stacked.1} parent=5 // pred_fallthru
        _
      %p200 = scmp.le.s32.totalorder 1, %s13
      %p201 = scmp.lt.s32.totalorder %s13, 7
      %p202 = pnand %p200, %p201
      %p203 = pneg %p202
      // Predicated region
      $region33: #{_forward_stacked.1} parent=5 // pred_check
        _
      $region34: #{_forward_stacked.1} parent=5 // pred_check_branch
        %205 = sbr.rel (%p202) target = $region36
      $region35: #{_forward_stacked.1} parent=5 // pred_region
        %s206 = ssub.s32 %s13, 1
        %p207 = scmp.lt.s32.totalorder %s23, 2
        %s208 = scalar_select %p207, %s23, 2
        %p209 = scmp.lt.s32.totalorder %s22, 1
        %s210 = scalar_select %p209, %s22, 1
        %s211 = smul.addr %s210, 64
        %s212 = smul.addr %s208, 128
        %s213 = sadd.s32 %s211, %s212
        %s214 = smul.addr %s213, 8
        %s215 = scalar_lea.vmem %s0, %s214
        %p216 = pneg %p53
        %p217 = pneg %p50
        %p218 = scmp.lt.s32.totalorder %s23, 2
        %s219 = scalar_select %p218, %s23, 2
        %p220 = scmp.lt.s32.totalorder %s22, 1
        %s221 = scalar_select %p220, %s22, 1
        %s222 = smul.addr %s221, 32
        %s223 = smul.addr %s219, 64
        %s224 = sadd.s32 %s222, %s223
        %s225 = smul.addr %s224, 4
        %s226 = scalar_lea.vmem %s1, %s225
        %p227 = pneg %p81
        %p228 = pneg %p78
        %p229 = pneg %p102
        %p230 = pneg %p99
        %p231 = pneg %p123
        %p232 = pneg %p120
        %p233 = pneg %p151
        %p234 = pneg %p148
        %s235 = sand.u32 %s138, 1
        %s236 = scalar_lea.sflag [#allocation5], %s235
        %s237 = sand.u32 %s138, 1
        %s238 = smul.addr %s237, 256
        %s239 = scalar_lea.vmem [#allocation4], %s238
        %p240 = scmp.lt.s32.totalorder %s23, 2
        %s241 = scalar_select %p240, %s23, 2
        %p242 = scmp.lt.s32.totalorder %s22, 1
        %s243 = scalar_select %p242, %s22, 1
        %s244 = smul.addr %s243, 64
        %s245 = smul.addr %s241, 128
        %s246 = sadd.s32 %s244, %s245
        %s247 = smul.addr %s246, 8
        %s248 = scalar_lea.vmem %s0, %s247
        %p249 = scmp.lt.s32.totalorder %s23, 2
        %s250 = scalar_select %p249, %s23, 2
        %p251 = scmp.lt.s32.totalorder %s22, 1
        %s252 = scalar_select %p251, %s22, 1
        %s253 = smul.addr %s252, 32
        %s254 = smul.addr %s250, 64
        %s255 = sadd.s32 %s253, %s254
        %s256 = smul.addr %s255, 4
        %s257 = scalar_lea.vmem %s1, %s256
        %p259 = scmp.eq.s32.totalorder %s23, 0
        // Predicated region
        $region37: #{_forward_stacked.1} parent=35 // pred_check
          %p260 = pneg %p259
        $region38: #{_forward_stacked.1} parent=35 // pred_check_branch
          %262 = sbr.rel (%p260) target = $region40
        $region39: #{_forward_stacked.1} parent=35 // pred_region
          %263 = vst [vmem:[#allocation2] sm:$0xff] 0
          %264 = vst [vmem:[#allocation2 + $0x8] sm:$0xff] 0
          %265 = vst [vmem:[#allocation2 + $0x10] sm:$0xff] 0
          %266 = vst [vmem:[#allocation2 + $0x18] sm:$0xff] 0
          %267 = vst [vmem:[#allocation2 + $0x20] sm:$0xff] 0
          %268 = vst [vmem:[#allocation2 + $0x28] sm:$0xff] 0
          %269 = vst [vmem:[#allocation2 + $0x30] sm:$0xff] 0
          %270 = vst [vmem:[#allocation2 + $0x38] sm:$0xff] 0
          %271 = vst [vmem:[#allocation3] sm:$0xff] 0.0
          %272 = vst [vmem:[#allocation3 + $0x8] sm:$0xff] 0.0
          %273 = vst [vmem:[#allocation3 + $0x10] sm:$0xff] 0.0
          %274 = vst [vmem:[#allocation3 + $0x18] sm:$0xff] 0.0
          %275 = vst [vmem:[#allocation3 + $0x20] sm:$0xff] 0.0
          %276 = vst [vmem:[#allocation3 + $0x28] sm:$0xff] 0.0
          %277 = vst [vmem:[#allocation3 + $0x30] sm:$0xff] 0.0
          %278 = vst [vmem:[#allocation3 + $0x38] sm:$0xff] 0.0
          %279 = vst [vmem:[#allocation3 + $0x40] sm:$0xff] 0.0
          %280 = vst [vmem:[#allocation3 + $0x48] sm:$0xff] 0.0
          %281 = vst [vmem:[#allocation3 + $0x50] sm:$0xff] 0.0
          %282 = vst [vmem:[#allocation3 + $0x58] sm:$0xff] 0.0
          %283 = vst [vmem:[#allocation3 + $0x60] sm:$0xff] 0.0
          %284 = vst [vmem:[#allocation3 + $0x68] sm:$0xff] 0.0
          %285 = vst [vmem:[#allocation3 + $0x70] sm:$0xff] 0.0
          %286 = vst [vmem:[#allocation3 + $0x78] sm:$0xff] 0.0
        $region40: #{_forward_stacked.1} parent=35 // pred_fallthru
          _
        %v287 = vld [vmem:[%s248 + $0x18] sm:$0xff]
        %v288 = vld [vmem:[%s248 + $0x38] sm:$0xff]
        %v289 = vld [vmem:[%s248 + $0x58] sm:$0xff]
        %v290 = vld [vmem:[%s248 + $0x78] sm:$0xff]
        %v291 = vld [vmem:[%s248 + $0x98] sm:$0xff]
        %v292 = vld [vmem:[%s248 + $0xb8] sm:$0xff]
        %v293 = vld [vmem:[%s248 + $0xd8] sm:$0xff]
        %v294 = vld [vmem:[%s248 + $0xf8] sm:$0xff]
        %v295 = vld [vmem:[%s248 + $0x118] sm:$0xff]
        %v296 = vld [vmem:[%s248 + $0x138] sm:$0xff]
        %v297 = vld [vmem:[%s248 + $0x158] sm:$0xff]
        %v298 = vld [vmem:[%s248 + $0x178] sm:$0xff]
        %v299 = vld [vmem:[%s248 + $0x198] sm:$0xff]
        %v300 = vld [vmem:[%s248 + $0x1b8] sm:$0xff]
        %v301 = vld [vmem:[%s248 + $0x1d8] sm:$0xff]
        %v302 = vld [vmem:[%s248 + $0x1f8] sm:$0xff]
        %v303 = vld [vmem:[#allocation2] sm:$0xff]
        %v304 = vld [vmem:[#allocation2 + $0x8] sm:$0xff]
        %v305 = vld [vmem:[#allocation2 + $0x10] sm:$0xff]
        %v306 = vld [vmem:[#allocation2 + $0x18] sm:$0xff]
        %v307 = vld [vmem:[#allocation2 + $0x20] sm:$0xff]
        %v308 = vld [vmem:[#allocation2 + $0x28] sm:$0xff]
        %v309 = vld [vmem:[#allocation2 + $0x30] sm:$0xff]
        %v310 = vld [vmem:[#allocation2 + $0x38] sm:$0xff]
        %v311 = vld [vmem:[#allocation3] sm:$0xff]
        %v312 = vld [vmem:[#allocation3 + $0x8] sm:$0xff]
        %v313 = vld [vmem:[#allocation3 + $0x10] sm:$0xff]
        %v314 = vld [vmem:[#allocation3 + $0x18] sm:$0xff]
        %v315 = vld [vmem:[#allocation3 + $0x20] sm:$0xff]
        %v316 = vld [vmem:[#allocation3 + $0x28] sm:$0xff]
        %v317 = vld [vmem:[#allocation3 + $0x30] sm:$0xff]
        %v318 = vld [vmem:[#allocation3 + $0x38] sm:$0xff]
        %v319 = vld [vmem:[#allocation3 + $0x40] sm:$0xff]
        %v320 = vld [vmem:[#allocation3 + $0x48] sm:$0xff]
        %v321 = vld [vmem:[#allocation3 + $0x50] sm:$0xff]
        %v322 = vld [vmem:[#allocation3 + $0x58] sm:$0xff]
        %v323 = vld [vmem:[#allocation3 + $0x60] sm:$0xff]
        %v324 = vld [vmem:[#allocation3 + $0x68] sm:$0xff]
        %v325 = vld [vmem:[#allocation3 + $0x70] sm:$0xff]
        %v326 = vld [vmem:[#allocation3 + $0x78] sm:$0xff]
        %v327 = vld [vmem:[%s257] sm:$0xf]
        %v328 = vld [vmem:[%s257 + $0x4] sm:$0xf]
        %v329 = vld [vmem:[%s257 + $0x8] sm:$0xf]
        %v330 = vld [vmem:[%s257 + $0xc] sm:$0xf]
        %v331 = vld [vmem:[%s257 + $0x10] sm:$0xf]
        %v332 = vld [vmem:[%s257 + $0x14] sm:$0xf]
        %v333 = vld [vmem:[%s257 + $0x18] sm:$0xf]
        %v334 = vld [vmem:[%s257 + $0x1c] sm:$0xf]
        %v335 = vld [vmem:[%s257 + $0x20] sm:$0xf]
        %v336 = vld [vmem:[%s257 + $0x24] sm:$0xf]
        %v337 = vld [vmem:[%s257 + $0x28] sm:$0xf]
        %v338 = vld [vmem:[%s257 + $0x2c] sm:$0xf]
        %v339 = vld [vmem:[%s257 + $0x30] sm:$0xf]
        %v340 = vld [vmem:[%s257 + $0x34] sm:$0xf]
        %v341 = vld [vmem:[%s257 + $0x38] sm:$0xf]
        %v342 = vld [vmem:[%s257 + $0x3c] sm:$0xf]
        %v359 = vunpack.c.l.b16 %v327
        %v360 = vunpack.c.l.b16 %v328
        %v361 = vunpack.c.l.b16 %v329
        %v362 = vunpack.c.l.b16 %v330
        %v363 = vunpack.c.l.b16 %v331
        %v364 = vunpack.c.l.b16 %v332
        %v365 = vunpack.c.l.b16 %v333
        %v366 = vunpack.c.l.b16 %v334
        %v367 = vunpack.c.l.b16 %v335
        %v368 = vunpack.c.l.b16 %v336
        %v369 = vunpack.c.l.b16 %v337
        %v370 = vunpack.c.l.b16 %v338
        %v371 = vunpack.c.l.b16 %v339
        %v372 = vunpack.c.l.b16 %v340
        %v373 = vunpack.c.l.b16 %v341
        %v374 = vunpack.c.l.b16 %v342
        %v375 = vpack.c.b16 %v360, %v359
        %v376 = vpack.c.b16 %v362, %v361
        %v377 = vpack.c.b16 %v364, %v363
        %v378 = vpack.c.b16 %v366, %v365
        %v379 = vpack.c.b16 %v368, %v367
        %v380 = vpack.c.b16 %v370, %v369
        %v381 = vpack.c.b16 %v372, %v371
        %v382 = vpack.c.b16 %v374, %v373
        %391 = vmatprep.subr.bf16.mxu0 0
        %392 = vmatpush1.bf16.msra.mxu0 %v303
        %393 = vmatprep.subr.bf16.mxu0 0
        %394 = vmatpush1.bf16.msra.mxu0 %v304
        %395 = vmatprep.subr.bf16.mxu0 0
        %396 = vmatpush1.bf16.msra.mxu0 %v305
        %397 = vmatprep.subr.bf16.mxu0 0
        %398 = vmatpush1.bf16.msra.mxu0 %v306
        %399 = vmatprep.subr.bf16.mxu0 0
        %400 = vmatpush1.bf16.msra.mxu0 %v307
        %401 = vmatprep.subr.bf16.mxu0 0
        %402 = vmatpush1.bf16.msra.mxu0 %v308
        %403 = vmatprep.subr.bf16.mxu0 0
        %404 = vmatpush1.bf16.msra.mxu0 %v309
        %405 = vmatprep.subr.bf16.mxu0 0
        %406 = vmatpush1.bf16.msra.mxu0 %v310
        %407 = vmatprep.subr.bf16.mxu0 0
        %408 = vmatpush1.bf16.msra.mxu0 0
        %409 = vmatprep.subr.bf16.mxu0 0
        %410 = vmatpush1.bf16.msra.mxu0 0
        %411 = vmatprep.subr.bf16.mxu0 0
        %412 = vmatpush1.bf16.msra.mxu0 0
        %413 = vmatprep.subr.bf16.mxu0 0
        %414 = vmatpush1.bf16.msra.mxu0 0
        %415 = vmatprep.subr.bf16.mxu0 0
        %416 = vmatpush1.bf16.msra.mxu0 0
        %417 = vmatprep.subr.bf16.mxu0 0
        %418 = vmatpush1.bf16.msra.mxu0 0
        %419 = vmatprep.subr.bf16.mxu0 0
        %420 = vmatpush1.bf16.msra.mxu0 0
        %421 = vmatprep.subr.bf16.mxu0 0
        %422 = vmatpush1.bf16.msra.mxu0 0
        %423 = vmatprep.mubr.bf16.mxu0 0
        %424 = vmatmul.mubr.bf16.gmra.mrb[0].mxu0 %v375
        %v425 = vpop.f32.mrb[0].mxu0
        %v426 = vadd.f32 0.0, %v425
        %v427 = vpop.f32.mrb[0].mxu0
        %v428 = vpop.f32.mrb[0].mxu0
        %v429 = vadd.f32 0.0, %v428
        %v430 = vpop.f32.mrb[0].mxu0
        %431 = vmatprep.mubr.bf16.mxu0 0
        %432 = vmatmul.mubr.bf16.gmra.mrb[0].mxu0 %v376
        %v433 = vpop.f32.mrb[0].mxu0
        %v434 = vadd.f32 0.0, %v433
        %v435 = vpop.f32.mrb[0].mxu0
        %v436 = vpop.f32.mrb[0].mxu0
        %v437 = vadd.f32 0.0, %v436
        %v438 = vpop.f32.mrb[0].mxu0
        %439 = vmatprep.mubr.bf16.mxu0 0
        %440 = vmatmul.mubr.bf16.gmra.mrb[0].mxu0 %v377
        %v441 = vpop.f32.mrb[0].mxu0
        %v442 = vadd.f32 0.0, %v441
        %v443 = vpop.f32.mrb[0].mxu0
        %v444 = vpop.f32.mrb[0].mxu0
        %v445 = vadd.f32 0.0, %v444
        %v446 = vpop.f32.mrb[0].mxu0
        %447 = vmatprep.mubr.bf16.mxu0 0
        %448 = vmatmul.mubr.bf16.gmra.mrb[0].mxu0 %v378
        %v449 = vpop.f32.mrb[0].mxu0
        %v450 = vadd.f32 0.0, %v449
        %v451 = vpop.f32.mrb[0].mxu0
        %v452 = vpop.f32.mrb[0].mxu0
        %v453 = vadd.f32 0.0, %v452
        %v454 = vpop.f32.mrb[0].mxu0
        %455 = vmatprep.mubr.bf16.mxu0 0
        %456 = vmatmul.mubr.bf16.gmra.mrb[0].mxu0 %v379
        %v457 = vpop.f32.mrb[0].mxu0
        %v458 = vadd.f32 0.0, %v457
        %v459 = vpop.f32.mrb[0].mxu0
        %v460 = vpop.f32.mrb[0].mxu0
        %v461 = vadd.f32 0.0, %v460
        %v462 = vpop.f32.mrb[0].mxu0
        %463 = vmatprep.mubr.bf16.mxu0 0
        %464 = vmatmul.mubr.bf16.gmra.mrb[0].mxu0 %v380
        %v465 = vpop.f32.mrb[0].mxu0
        %v466 = vadd.f32 0.0, %v465
        %v467 = vpop.f32.mrb[0].mxu0
        %v468 = vpop.f32.mrb[0].mxu0
        %v469 = vadd.f32 0.0, %v468
        %v470 = vpop.f32.mrb[0].mxu0
        %471 = vmatprep.mubr.bf16.mxu0 0
        %472 = vmatmul.mubr.bf16.gmra.mrb[0].mxu0 %v381
        %v473 = vpop.f32.mrb[0].mxu0
        %v474 = vadd.f32 0.0, %v473
        %v475 = vpop.f32.mrb[0].mxu0
        %v476 = vpop.f32.mrb[0].mxu0
        %v477 = vadd.f32 0.0, %v476
        %v478 = vpop.f32.mrb[0].mxu0
        %479 = vmatprep.mubr.bf16.mxu0 0
        %480 = vmatmul.mubr.bf16.gmra.mrb[0].mxu0 %v382
        %v481 = vpop.f32.mrb[0].mxu0
        %v482 = vadd.f32 0.0, %v481
        %v483 = vpop.f32.mrb[0].mxu0
        %v484 = vpop.f32.mrb[0].mxu0
        %v485 = vadd.f32 0.0, %v484
        %v486 = vpop.f32.mrb[0].mxu0
        %487 = vdwg.mxu0
        %v488 = vunpack.c.l.bf16 %v327
        %v489 = vunpack.c.l.bf16 %v328
        %v490 = vunpack.c.l.bf16 %v329
        %v491 = vunpack.c.l.bf16 %v330
        %v492 = vunpack.c.l.bf16 %v331
        %v493 = vunpack.c.l.bf16 %v332
        %v494 = vunpack.c.l.bf16 %v333
        %v495 = vunpack.c.l.bf16 %v334
        %v496 = vunpack.c.l.bf16 %v335
        %v497 = vunpack.c.l.bf16 %v336
        %v498 = vunpack.c.l.bf16 %v337
        %v499 = vunpack.c.l.bf16 %v338
        %v500 = vunpack.c.l.bf16 %v339
        %v501 = vunpack.c.l.bf16 %v340
        %v502 = vunpack.c.l.bf16 %v341
        %v503 = vunpack.c.l.bf16 %v342
        %504 = vmatprep.subr.mxu0 0.0
        %505 = vmatpush1.msra.mxu0 %v311
        %506 = vmatprep.subr.mxu0 0.0
        %507 = vmatpush1.msra.mxu0 %v312
        %508 = vmatprep.subr.mxu0 0.0
        %509 = vmatpush1.msra.mxu0 %v313
        %510 = vmatprep.subr.mxu0 0.0
        %511 = vmatpush1.msra.mxu0 %v314
        %512 = vmatprep.subr.mxu0 0.0
        %513 = vmatpush1.msra.mxu0 %v315
        %514 = vmatprep.subr.mxu0 0.0
        %515 = vmatpush1.msra.mxu0 %v316
        %516 = vmatprep.subr.mxu0 0.0
        %517 = vmatpush1.msra.mxu0 %v317
        %518 = vmatprep.subr.mxu0 0.0
        %519 = vmatpush1.msra.mxu0 %v318
        %520 = vmatprep.subr.mxu0 0.0
        %521 = vmatpush1.msra.mxu0 %v319
        %522 = vmatprep.subr.mxu0 0.0
        %523 = vmatpush1.msra.mxu0 %v320
        %524 = vmatprep.subr.mxu0 0.0
        %525 = vmatpush1.msra.mxu0 %v321
        %526 = vmatprep.subr.mxu0 0.0
        %527 = vmatpush1.msra.mxu0 %v322
        %528 = vmatprep.subr.mxu0 0.0
        %529 = vmatpush1.msra.mxu0 %v323
        %530 = vmatprep.subr.mxu0 0.0
        %531 = vmatpush1.msra.mxu0 %v324
        %532 = vmatprep.subr.mxu0 0.0
        %533 = vmatpush1.msra.mxu0 %v325
        %534 = vmatprep.subr.mxu0 0.0
        %535 = vmatpush1.msra.mxu0 %v326
        %536 = vmatprep.subr.mxu0 0.0
        %537 = vmatpush1.msra.mxu0 0.0
        %538 = vmatprep.subr.mxu0 0.0
        %539 = vmatpush1.msra.mxu0 0.0
        %540 = vmatprep.subr.mxu0 0.0
        %541 = vmatpush1.msra.mxu0 0.0
        %542 = vmatprep.subr.mxu0 0.0
        %543 = vmatpush1.msra.mxu0 0.0
        %544 = vmatprep.subr.mxu0 0.0
        %545 = vmatpush1.msra.mxu0 0.0
        %546 = vmatprep.subr.mxu0 0.0
        %547 = vmatpush1.msra.mxu0 0.0
        %548 = vmatprep.subr.mxu0 0.0
        %549 = vmatpush1.msra.mxu0 0.0
        %550 = vmatprep.subr.mxu0 0.0
        %551 = vmatpush1.msra.mxu0 0.0
        %552 = vmatprep.subr.mxu0 0.0
        %553 = vmatpush1.msra.mxu0 0.0
        %554 = vmatprep.subr.mxu0 0.0
        %555 = vmatpush1.msra.mxu0 0.0
        %556 = vmatprep.subr.mxu0 0.0
        %557 = vmatpush1.msra.mxu0 0.0
        %558 = vmatprep.subr.mxu0 0.0
        %559 = vmatpush1.msra.mxu0 0.0
        %560 = vmatprep.subr.mxu0 0.0
        %561 = vmatpush1.msra.mxu0 0.0
        %562 = vmatprep.subr.mxu0 0.0
        %563 = vmatpush1.msra.mxu0 0.0
        %564 = vmatprep.subr.mxu0 0.0
        %565 = vmatpush1.msra.mxu0 0.0
        %566 = vmatprep.subr.mxu0 0.0
        %567 = vmatpush1.msra.mxu0 0.0
        %568 = vmatprep.mubr.f32.mxu0 0.0
        %569 = vmatmul.mubr.f32.gmra.mrb[0].mxu0 %v488
        %v570 = vpop.f32.mrb[0].mxu0
        %v571 = vadd.f32 0.0, %v570
        %v572 = vpop.f32.mrb[0].mxu0
        %573 = vmatprep.mubr.f32.mxu0 0.0
        %574 = vmatmul.mubr.f32.gmra.mrb[0].mxu0 %v489
        %v575 = vpop.f32.mrb[0].mxu0
        %v576 = vadd.f32 0.0, %v575
        %v577 = vpop.f32.mrb[0].mxu0
        %578 = vmatprep.mubr.f32.mxu0 0.0
        %579 = vmatmul.mubr.f32.gmra.mrb[0].mxu0 %v490
        %v580 = vpop.f32.mrb[0].mxu0
        %v581 = vadd.f32 0.0, %v580
        %v582 = vpop.f32.mrb[0].mxu0
        %583 = vmatprep.mubr.f32.mxu0 0.0
        %584 = vmatmul.mubr.f32.gmra.mrb[0].mxu0 %v491
        %v585 = vpop.f32.mrb[0].mxu0
        %v586 = vadd.f32 0.0, %v585
        %v587 = vpop.f32.mrb[0].mxu0
        %588 = vmatprep.mubr.f32.mxu0 0.0
        %589 = vmatmul.mubr.f32.gmra.mrb[0].mxu0 %v492
        %v590 = vpop.f32.mrb[0].mxu0
        %v591 = vadd.f32 0.0, %v590
        %v592 = vpop.f32.mrb[0].mxu0
        %593 = vmatprep.mubr.f32.mxu0 0.0
        %594 = vmatmul.mubr.f32.gmra.mrb[0].mxu0 %v493
        %v595 = vpop.f32.mrb[0].mxu0
        %v596 = vadd.f32 0.0, %v595
        %v597 = vpop.f32.mrb[0].mxu0
        %598 = vmatprep.mubr.f32.mxu0 0.0
        %599 = vmatmul.mubr.f32.gmra.mrb[0].mxu0 %v494
        %v600 = vpop.f32.mrb[0].mxu0
        %v601 = vadd.f32 0.0, %v600
        %v602 = vpop.f32.mrb[0].mxu0
        %603 = vmatprep.mubr.f32.mxu0 0.0
        %604 = vmatmul.mubr.f32.gmra.mrb[0].mxu0 %v495
        %v605 = vpop.f32.mrb[0].mxu0
        %v606 = vadd.f32 0.0, %v605
        %v607 = vpop.f32.mrb[0].mxu0
        %608 = vmatprep.mubr.f32.mxu0 0.0
        %609 = vmatmul.mubr.f32.gmra.mrb[0].mxu0 %v496
        %v610 = vpop.f32.mrb[0].mxu0
        %v611 = vadd.f32 0.0, %v610
        %v612 = vpop.f32.mrb[0].mxu0
        %613 = vmatprep.mubr.f32.mxu0 0.0
        %614 = vmatmul.mubr.f32.gmra.mrb[0].mxu0 %v497
        %v615 = vpop.f32.mrb[0].mxu0
        %v616 = vadd.f32 0.0, %v615
        %v617 = vpop.f32.mrb[0].mxu0
        %618 = vmatprep.mubr.f32.mxu0 0.0
        %619 = vmatmul.mubr.f32.gmra.mrb[0].mxu0 %v498
        %v620 = vpop.f32.mrb[0].mxu0
        %v621 = vadd.f32 0.0, %v620
        %v622 = vpop.f32.mrb[0].mxu0
        %623 = vmatprep.mubr.f32.mxu0 0.0
        %624 = vmatmul.mubr.f32.gmra.mrb[0].mxu0 %v499
        %v625 = vpop.f32.mrb[0].mxu0
        %v626 = vadd.f32 0.0, %v625
        %v627 = vpop.f32.mrb[0].mxu0
        %628 = vmatprep.mubr.f32.mxu0 0.0
        %629 = vmatmul.mubr.f32.gmra.mrb[0].mxu0 %v500
        %v630 = vpop.f32.mrb[0].mxu0
        %v631 = vadd.f32 0.0, %v630
        %v632 = vpop.f32.mrb[0].mxu0
        %633 = vmatprep.mubr.f32.mxu0 0.0
        %634 = vmatmul.mubr.f32.gmra.mrb[0].mxu0 %v501
        %v635 = vpop.f32.mrb[0].mxu0
        %v636 = vadd.f32 0.0, %v635
        %v637 = vpop.f32.mrb[0].mxu0
        %638 = vmatprep.mubr.f32.mxu0 0.0
        %639 = vmatmul.mubr.f32.gmra.mrb[0].mxu0 %v502
        %v640 = vpop.f32.mrb[0].mxu0
        %v641 = vadd.f32 0.0, %v640
        %v642 = vpop.f32.mrb[0].mxu0
        %643 = vmatprep.mubr.f32.mxu0 0.0
        %644 = vmatmul.mubr.f32.gmra.mrb[0].mxu0 %v503
        %v645 = vpop.f32.mrb[0].mxu0
        %v646 = vadd.f32 0.0, %v645
        %v647 = vpop.f32.mrb[0].mxu0
        %648 = vdwg.mxu0
        %v649 = vpack.c.bf16 %v429, %v426
        %v650 = vpack.c.bf16 %v437, %v434
        %v651 = vpack.c.bf16 %v445, %v442
        %v652 = vpack.c.bf16 %v453, %v450
        %v653 = vpack.c.bf16 %v461, %v458
        %v654 = vpack.c.bf16 %v469, %v466
        %v655 = vpack.c.bf16 %v477, %v474
        %v656 = vpack.c.bf16 %v485, %v482
        %v657 = vld [vmem:[%s3] sm:$0xf]
        %v658 = vld [vmem:[%s3 + $0x4] sm:$0xf]
        %v659 = vld [vmem:[%s3 + $0x8] sm:$0xf]
        %v660 = vld [vmem:[%s3 + $0xc] sm:$0xf]
        %v661 = vld [vmem:[%s3 + $0x10] sm:$0xf]
        %v662 = vld [vmem:[%s3 + $0x14] sm:$0xf]
        %v663 = vld [vmem:[%s3 + $0x18] sm:$0xf]
        %v664 = vld [vmem:[%s3 + $0x1c] sm:$0xf]
        %v665 = vld [vmem:[%s3 + $0x20] sm:$0xf]
        %v666 = vld [vmem:[%s3 + $0x24] sm:$0xf]
        %v667 = vld [vmem:[%s3 + $0x28] sm:$0xf]
        %v668 = vld [vmem:[%s3 + $0x2c] sm:$0xf]
        %v669 = vld [vmem:[%s3 + $0x30] sm:$0xf]
        %v670 = vld [vmem:[%s3 + $0x34] sm:$0xf]
        %v671 = vld [vmem:[%s3 + $0x38] sm:$0xf]
        %v672 = vld [vmem:[%s3 + $0x3c] sm:$0xf]
        %v689 = vunpack.c.l.b16 %v657
        %v690 = vunpack.c.l.b16 %v658
        %v691 = vunpack.c.l.b16 %v659
        %v692 = vunpack.c.l.b16 %v660
        %v693 = vunpack.c.l.b16 %v661
        %v694 = vunpack.c.l.b16 %v662
        %v695 = vunpack.c.l.b16 %v663
        %v696 = vunpack.c.l.b16 %v664
        %v697 = vunpack.c.l.b16 %v665
        %v698 = vunpack.c.l.b16 %v666
        %v699 = vunpack.c.l.b16 %v667
        %v700 = vunpack.c.l.b16 %v668
        %v701 = vunpack.c.l.b16 %v669
        %v702 = vunpack.c.l.b16 %v670
        %v703 = vunpack.c.l.b16 %v671
        %v704 = vunpack.c.l.b16 %v672
        %v705 = vpack.c.b16 %v690, %v689
        %v706 = vpack.c.b16 %v692, %v691
        %v707 = vpack.c.b16 %v694, %v693
        %v708 = vpack.c.b16 %v696, %v695
        %v709 = vpack.c.b16 %v698, %v697
        %v710 = vpack.c.b16 %v700, %v699
        %v711 = vpack.c.b16 %v702, %v701
        %v712 = vpack.c.b16 %v704, %v703
        %721 = vmatprep.subr.bf16.mxu0 0
        %722 = vmatpush1.bf16.msra.mxu0 %v705
        %723 = vmatprep.subr.bf16.mxu0 0
        %724 = vmatpush1.bf16.msra.mxu0 %v706
        %725 = vmatprep.subr.bf16.mxu0 0
        %726 = vmatpush1.bf16.msra.mxu0 %v707
        %727 = vmatprep.subr.bf16.mxu0 0
        %728 = vmatpush1.bf16.msra.mxu0 %v708
        %729 = vmatprep.subr.bf16.mxu0 0
        %730 = vmatpush1.bf16.msra.mxu0 %v709
        %731 = vmatprep.subr.bf16.mxu0 0
        %732 = vmatpush1.bf16.msra.mxu0 %v710
        %733 = vmatprep.subr.bf16.mxu0 0
        %734 = vmatpush1.bf16.msra.mxu0 %v711
        %735 = vmatprep.subr.bf16.mxu0 0
        %736 = vmatpush1.bf16.msra.mxu0 %v712
        %737 = vmatprep.subr.bf16.mxu0 0
        %738 = vmatpush1.bf16.msra.mxu0 0
        %739 = vmatprep.subr.bf16.mxu0 0
        %740 = vmatpush1.bf16.msra.mxu0 0
        %741 = vmatprep.subr.bf16.mxu0 0
        %742 = vmatpush1.bf16.msra.mxu0 0
        %743 = vmatprep.subr.bf16.mxu0 0
        %744 = vmatpush1.bf16.msra.mxu0 0
        %745 = vmatprep.subr.bf16.mxu0 0
        %746 = vmatpush1.bf16.msra.mxu0 0
        %747 = vmatprep.subr.bf16.mxu0 0
        %748 = vmatpush1.bf16.msra.mxu0 0
        %749 = vmatprep.subr.bf16.mxu0 0
        %750 = vmatpush1.bf16.msra.mxu0 0
        %751 = vmatprep.subr.bf16.mxu0 0
        %752 = vmatpush1.bf16.msra.mxu0 0
        %753 = vmatprep.mubr.bf16.mxu0 0
        %754 = vmatmul.mubr.bf16.gmra.mrb[0].mxu0 %v649
        %v755 = vpop.f32.mrb[0].mxu0
        %v756 = vadd.f32 0.0, %v755
        %v757 = vpop.f32.mrb[0].mxu0
        %v758 = vpop.f32.mrb[0].mxu0
        %v759 = vadd.f32 0.0, %v758
        %v760 = vpop.f32.mrb[0].mxu0
        %761 = vmatprep.mubr.bf16.mxu0 0
        %762 = vmatmul.mubr.bf16.gmra.mrb[0].mxu0 %v650
        %v763 = vpop.f32.mrb[0].mxu0
        %v764 = vadd.f32 0.0, %v763
        %v765 = vpop.f32.mrb[0].mxu0
        %v766 = vpop.f32.mrb[0].mxu0
        %v767 = vadd.f32 0.0, %v766
        %v768 = vpop.f32.mrb[0].mxu0
        %769 = vmatprep.mubr.bf16.mxu0 0
        %770 = vmatmul.mubr.bf16.gmra.mrb[0].mxu0 %v651
        %v771 = vpop.f32.mrb[0].mxu0
        %v772 = vadd.f32 0.0, %v771
        %v773 = vpop.f32.mrb[0].mxu0
        %v774 = vpop.f32.mrb[0].mxu0
        %v775 = vadd.f32 0.0, %v774
        %v776 = vpop.f32.mrb[0].mxu0
        %777 = vmatprep.mubr.bf16.mxu0 0
        %778 = vmatmul.mubr.bf16.gmra.mrb[0].mxu0 %v652
        %v779 = vpop.f32.mrb[0].mxu0
        %v780 = vadd.f32 0.0, %v779
        %v781 = vpop.f32.mrb[0].mxu0
        %v782 = vpop.f32.mrb[0].mxu0
        %v783 = vadd.f32 0.0, %v782
        %v784 = vpop.f32.mrb[0].mxu0
        %785 = vmatprep.mubr.bf16.mxu0 0
        %786 = vmatmul.mubr.bf16.gmra.mrb[0].mxu0 %v653
        %v787 = vpop.f32.mrb[0].mxu0
        %v788 = vadd.f32 0.0, %v787
        %v789 = vpop.f32.mrb[0].mxu0
        %v790 = vpop.f32.mrb[0].mxu0
        %v791 = vadd.f32 0.0, %v790
        %v792 = vpop.f32.mrb[0].mxu0
        %793 = vmatprep.mubr.bf16.mxu0 0
        %794 = vmatmul.mubr.bf16.gmra.mrb[0].mxu0 %v654
        %v795 = vpop.f32.mrb[0].mxu0
        %v796 = vadd.f32 0.0, %v795
        %v797 = vpop.f32.mrb[0].mxu0
        %v798 = vpop.f32.mrb[0].mxu0
        %v799 = vadd.f32 0.0, %v798
        %v800 = vpop.f32.mrb[0].mxu0
        %801 = vmatprep.mubr.bf16.mxu0 0
        %802 = vmatmul.mubr.bf16.gmra.mrb[0].mxu0 %v655
        %v803 = vpop.f32.mrb[0].mxu0
        %v804 = vadd.f32 0.0, %v803
        %v805 = vpop.f32.mrb[0].mxu0
        %v806 = vpop.f32.mrb[0].mxu0
        %v807 = vadd.f32 0.0, %v806
        %v808 = vpop.f32.mrb[0].mxu0
        %809 = vmatprep.mubr.bf16.mxu0 0
        %810 = vmatmul.mubr.bf16.gmra.mrb[0].mxu0 %v656
        %v811 = vpop.f32.mrb[0].mxu0
        %v812 = vadd.f32 0.0, %v811
        %v813 = vpop.f32.mrb[0].mxu0
        %v814 = vpop.f32.mrb[0].mxu0
        %v815 = vadd.f32 0.0, %v814
        %v816 = vpop.f32.mrb[0].mxu0
        %817 = vdwg.mxu0
        %v818 = vadd.f32 %v287, %v756
        %v819 = vadd.f32 %v288, %v759
        %v820 = vadd.f32 %v289, %v764
        %v821 = vadd.f32 %v290, %v767
        %v822 = vadd.f32 %v291, %v772
        %v823 = vadd.f32 %v292, %v775
        %v824 = vadd.f32 %v293, %v780
        %v825 = vadd.f32 %v294, %v783
        %v826 = vadd.f32 %v295, %v788
        %v827 = vadd.f32 %v296, %v791
        %v828 = vadd.f32 %v297, %v796
        %v829 = vadd.f32 %v298, %v799
        %v830 = vadd.f32 %v299, %v804
        %v831 = vadd.f32 %v300, %v807
        %v832 = vadd.f32 %v301, %v812
        %v833 = vadd.f32 %v302, %v815
        %v834 = vxor.u32 %v818, 2147483648
        %v835 = vxor.u32 %v819, 2147483648
        %v836 = vxor.u32 %v820, 2147483648
        %v837 = vxor.u32 %v821, 2147483648
        %v838 = vxor.u32 %v822, 2147483648
        %v839 = vxor.u32 %v823, 2147483648
        %v840 = vxor.u32 %v824, 2147483648
        %v841 = vxor.u32 %v825, 2147483648
        %v842 = vxor.u32 %v826, 2147483648
        %v843 = vxor.u32 %v827, 2147483648
        %v844 = vxor.u32 %v828, 2147483648
        %v845 = vxor.u32 %v829, 2147483648
        %v846 = vxor.u32 %v830, 2147483648
        %v847 = vxor.u32 %v831, 2147483648
        %v848 = vxor.u32 %v832, 2147483648
        %v849 = vxor.u32 %v833, 2147483648
        %v850 = vmul.f32 %v834, 1.442695
        %v851 = vpow.pop %v850
        %v852 = vmul.f32 %v835, 1.442695
        %v853 = vpow.pop %v852
        %v854 = vmul.f32 %v836, 1.442695
        %v855 = vpow.pop %v854
        %v856 = vmul.f32 %v837, 1.442695
        %v857 = vpow.pop %v856
        %v858 = vmul.f32 %v838, 1.442695
        %v859 = vpow.pop %v858
        %v860 = vmul.f32 %v839, 1.442695
        %v861 = vpow.pop %v860
        %v862 = vmul.f32 %v840, 1.442695
        %v863 = vpow.pop %v862
        %v864 = vmul.f32 %v841, 1.442695
        %v865 = vpow.pop %v864
        %v866 = vmul.f32 %v842, 1.442695
        %v867 = vpow.pop %v866
        %v868 = vmul.f32 %v843, 1.442695
        %v869 = vpow.pop %v868
        %v870 = vmul.f32 %v844, 1.442695
        %v871 = vpow.pop %v870
        %v872 = vmul.f32 %v845, 1.442695
        %v873 = vpow.pop %v872
        %v874 = vmul.f32 %v846, 1.442695
        %v875 = vpow.pop %v874
        %v876 = vmul.f32 %v847, 1.442695
        %v877 = vpow.pop %v876
        %v878 = vmul.f32 %v848, 1.442695
        %v879 = vpow.pop %v878
        %v880 = vmul.f32 %v849, 1.442695
        %v881 = vpow.pop %v880
        %v882 = vadd.f32 %v851, 1.0
        %v883 = vadd.f32 %v853, 1.0
        %v884 = vadd.f32 %v855, 1.0
        %v885 = vadd.f32 %v857, 1.0
        %v886 = vadd.f32 %v859, 1.0
        %v887 = vadd.f32 %v861, 1.0
        %v888 = vadd.f32 %v863, 1.0
        %v889 = vadd.f32 %v865, 1.0
        %v890 = vadd.f32 %v867, 1.0
        %v891 = vadd.f32 %v869, 1.0
        %v892 = vadd.f32 %v871, 1.0
        %v893 = vadd.f32 %v873, 1.0
        %v894 = vadd.f32 %v875, 1.0
        %v895 = vadd.f32 %v877, 1.0
        %v896 = vadd.f32 %v879, 1.0
        %v897 = vadd.f32 %v881, 1.0
        %v898 = vrcp.pop %v882
        %v899 = vmul.f32 1.0, %v898
        %v900 = vrcp.pop %v883
        %v901 = vmul.f32 1.0, %v900
        %v902 = vrcp.pop %v884
        %v903 = vmul.f32 1.0, %v902
        %v904 = vrcp.pop %v885
        %v905 = vmul.f32 1.0, %v904
        %v906 = vrcp.pop %v886
        %v907 = vmul.f32 1.0, %v906
        %v908 = vrcp.pop %v887
        %v909 = vmul.f32 1.0, %v908
        %v910 = vrcp.pop %v888
        %v911 = vmul.f32 1.0, %v910
        %v912 = vrcp.pop %v889
        %v913 = vmul.f32 1.0, %v912
        %v914 = vrcp.pop %v890
        %v915 = vmul.f32 1.0, %v914
        %v916 = vrcp.pop %v891
        %v917 = vmul.f32 1.0, %v916
        %v918 = vrcp.pop %v892
        %v919 = vmul.f32 1.0, %v918
        %v920 = vrcp.pop %v893
        %v921 = vmul.f32 1.0, %v920
        %v922 = vrcp.pop %v894
        %v923 = vmul.f32 1.0, %v922
        %v924 = vrcp.pop %v895
        %v925 = vmul.f32 1.0, %v924
        %v926 = vrcp.pop %v896
        %v927 = vmul.f32 1.0, %v926
        %v928 = vrcp.pop %v897
        %v929 = vmul.f32 1.0, %v928
        %v930 = vadd.f32 %v426, 0.0
        %v931 = vadd.f32 %v429, 0.0
        %v932 = vadd.f32 %v434, 0.0
        %v933 = vadd.f32 %v437, 0.0
        %v934 = vadd.f32 %v442, 0.0
        %v935 = vadd.f32 %v445, 0.0
        %v936 = vadd.f32 %v450, 0.0
        %v937 = vadd.f32 %v453, 0.0
        %v938 = vadd.f32 %v458, 0.0
        %v939 = vadd.f32 %v461, 0.0
        %v940 = vadd.f32 %v466, 0.0
        %v941 = vadd.f32 %v469, 0.0
        %v942 = vadd.f32 %v474, 0.0
        %v943 = vadd.f32 %v477, 0.0
        %v944 = vadd.f32 %v482, 0.0
        %v945 = vadd.f32 %v485, 0.0
        %v946 = vmul.f32 %v899, %v571
        %v947 = vmul.f32 %v901, %v576
        %v948 = vmul.f32 %v903, %v581
        %v949 = vmul.f32 %v905, %v586
        %v950 = vmul.f32 %v907, %v591
        %v951 = vmul.f32 %v909, %v596
        %v952 = vmul.f32 %v911, %v601
        %v953 = vmul.f32 %v913, %v606
        %v954 = vmul.f32 %v915, %v611
        %v955 = vmul.f32 %v917, %v616
        %v956 = vmul.f32 %v919, %v621
        %v957 = vmul.f32 %v921, %v626
        %v958 = vmul.f32 %v923, %v631
        %v959 = vmul.f32 %v925, %v636
        %v960 = vmul.f32 %v927, %v641
        %v961 = vmul.f32 %v929, %v646
        %v962 = vadd.f32 %v946, 0.0
        %v963 = vadd.f32 %v947, 0.0
        %v964 = vadd.f32 %v948, 0.0
        %v965 = vadd.f32 %v949, 0.0
        %v966 = vadd.f32 %v950, 0.0
        %v967 = vadd.f32 %v951, 0.0
        %v968 = vadd.f32 %v952, 0.0
        %v969 = vadd.f32 %v953, 0.0
        %v970 = vadd.f32 %v954, 0.0
        %v971 = vadd.f32 %v955, 0.0
        %v972 = vadd.f32 %v956, 0.0
        %v973 = vadd.f32 %v957, 0.0
        %v974 = vadd.f32 %v958, 0.0
        %v975 = vadd.f32 %v959, 0.0
        %v976 = vadd.f32 %v960, 0.0
        %v977 = vadd.f32 %v961, 0.0
        %s978 = scalar_lea.vmem %s257, 64
        %v979 = vld [vmem:[%s978] sm:$0xf]
        %v980 = vld [vmem:[%s978 + $0x4] sm:$0xf]
        %v981 = vld [vmem:[%s978 + $0x8] sm:$0xf]
        %v982 = vld [vmem:[%s978 + $0xc] sm:$0xf]
        %v983 = vld [vmem:[%s978 + $0x10] sm:$0xf]
        %v984 = vld [vmem:[%s978 + $0x14] sm:$0xf]
        %v985 = vld [vmem:[%s978 + $0x18] sm:$0xf]
        %v986 = vld [vmem:[%s978 + $0x1c] sm:$0xf]
        %v987 = vld [vmem:[%s978 + $0x20] sm:$0xf]
        %v988 = vld [vmem:[%s978 + $0x24] sm:$0xf]
        %v989 = vld [vmem:[%s978 + $0x28] sm:$0xf]
        %v990 = vld [vmem:[%s978 + $0x2c] sm:$0xf]
        %v991 = vld [vmem:[%s978 + $0x30] sm:$0xf]
        %v992 = vld [vmem:[%s978 + $0x34] sm:$0xf]
        %v993 = vld [vmem:[%s978 + $0x38] sm:$0xf]
        %v994 = vld [vmem:[%s978 + $0x3c] sm:$0xf]
        %v1011 = vunpack.c.l.b16 %v979
        %v1012 = vunpack.c.l.b16 %v980
        %v1013 = vunpack.c.l.b16 %v981
        %v1014 = vunpack.c.l.b16 %v982
        %v1015 = vunpack.c.l.b16 %v983
        %v1016 = vunpack.c.l.b16 %v984
        %v1017 = vunpack.c.l.b16 %v985
        %v1018 = vunpack.c.l.b16 %v986
        %v1019 = vunpack.c.l.b16 %v987
        %v1020 = vunpack.c.l.b16 %v988
        %v1021 = vunpack.c.l.b16 %v989
        %v1022 = vunpack.c.l.b16 %v990
        %v1023 = vunpack.c.l.b16 %v991
        %v1024 = vunpack.c.l.b16 %v992
        %v1025 = vunpack.c.l.b16 %v993
        %v1026 = vunpack.c.l.b16 %v994
        %v1027 = vpack.c.b16 %v1012, %v1011
        %v1028 = vpack.c.b16 %v1014, %v1013
        %v1029 = vpack.c.b16 %v1016, %v1015
        %v1030 = vpack.c.b16 %v1018, %v1017
        %v1031 = vpack.c.b16 %v1020, %v1019
        %v1032 = vpack.c.b16 %v1022, %v1021
        %v1033 = vpack.c.b16 %v1024, %v1023
        %v1034 = vpack.c.b16 %v1026, %v1025
        %1043 = vmatprep.subr.bf16.mxu0 0
        %1044 = vmatpush1.bf16.msra.mxu0 %v303
        %1045 = vmatprep.subr.bf16.mxu0 0
        %1046 = vmatpush1.bf16.msra.mxu0 %v304
        %1047 = vmatprep.subr.bf16.mxu0 0
        %1048 = vmatpush1.bf16.msra.mxu0 %v305
        %1049 = vmatprep.subr.bf16.mxu0 0
        %1050 = vmatpush1.bf16.msra.mxu0 %v306
        %1051 = vmatprep.subr.bf16.mxu0 0
        %1052 = vmatpush1.bf16.msra.mxu0 %v307
        %1053 = vmatprep.subr.bf16.mxu0 0
        %1054 = vmatpush1.bf16.msra.mxu0 %v308
        %1055 = vmatprep.subr.bf16.mxu0 0
        %1056 = vmatpush1.bf16.msra.mxu0 %v309
        %1057 = vmatprep.subr.bf16.mxu0 0
        %1058 = vmatpush1.bf16.msra.mxu0 %v310
        %1059 = vmatprep.subr.bf16.mxu0 0
        %1060 = vmatpush1.bf16.msra.mxu0 0
        %1061 = vmatprep.subr.bf16.mxu0 0
        %1062 = vmatpush1.bf16.msra.mxu0 0
        %1063 = vmatprep.subr.bf16.mxu0 0
        %1064 = vmatpush1.bf16.msra.mxu0 0
        %1065 = vmatprep.subr.bf16.mxu0 0
        %1066 = vmatpush1.bf16.msra.mxu0 0
        %1067 = vmatprep.subr.bf16.mxu0 0
        %1068 = vmatpush1.bf16.msra.mxu0 0
        %1069 = vmatprep.subr.bf16.mxu0 0
        %1070 = vmatpush1.bf16.msra.mxu0 0
        %1071 = vmatprep.subr.bf16.mxu0 0
        %1072 = vmatpush1.bf16.msra.mxu0 0
        %1073 = vmatprep.subr.bf16.mxu0 0
        %1074 = vmatpush1.bf16.msra.mxu0 0
        %1075 = vmatprep.mubr.bf16.mxu0 0
        %1076 = vmatmul.mubr.bf16.gmra.mrb[0].mxu0 %v1027
        %v1077 = vpop.f32.mrb[0].mxu0
        %v1078 = vadd.f32 0.0, %v1077
        %v1079 = vpop.f32.mrb[0].mxu0
        %v1080 = vpop.f32.mrb[0].mxu0
        %v1081 = vadd.f32 0.0, %v1080
        %v1082 = vpop.f32.mrb[0].mxu0
        %1083 = vmatprep.mubr.bf16.mxu0 0
        %1084 = vmatmul.mubr.bf16.gmra.mrb[0].mxu0 %v1028
        %v1085 = vpop.f32.mrb[0].mxu0
        %v1086 = vadd.f32 0.0, %v1085
        %v1087 = vpop.f32.mrb[0].mxu0
        %v1088 = vpop.f32.mrb[0].mxu0
        %v1089 = vadd.f32 0.0, %v1088
        %v1090 = vpop.f32.mrb[0].mxu0
        %1091 = vmatprep.mubr.bf16.mxu0 0
        %1092 = vmatmul.mubr.bf16.gmra.mrb[0].mxu0 %v1029
        %v1093 = vpop.f32.mrb[0].mxu0
        %v1094 = vadd.f32 0.0, %v1093
        %v1095 = vpop.f32.mrb[0].mxu0
        %v1096 = vpop.f32.mrb[0].mxu0
        %v1097 = vadd.f32 0.0, %v1096
        %v1098 = vpop.f32.mrb[0].mxu0
        %1099 = vmatprep.mubr.bf16.mxu0 0
        %1100 = vmatmul.mubr.bf16.gmra.mrb[0].mxu0 %v1030
        %v1101 = vpop.f32.mrb[0].mxu0
        %v1102 = vadd.f32 0.0, %v1101
        %v1103 = vpop.f32.mrb[0].mxu0
        %v1104 = vpop.f32.mrb[0].mxu0
        %v1105 = vadd.f32 0.0, %v1104
        %v1106 = vpop.f32.mrb[0].mxu0
        %1107 = vmatprep.mubr.bf16.mxu0 0
        %1108 = vmatmul.mubr.bf16.gmra.mrb[0].mxu0 %v1031
        %v1109 = vpop.f32.mrb[0].mxu0
        %v1110 = vadd.f32 0.0, %v1109
        %v1111 = vpop.f32.mrb[0].mxu0
        %v1112 = vpop.f32.mrb[0].mxu0
        %v1113 = vadd.f32 0.0, %v1112
        %v1114 = vpop.f32.mrb[0].mxu0
        %1115 = vmatprep.mubr.bf16.mxu0 0
        %1116 = vmatmul.mubr.bf16.gmra.mrb[0].mxu0 %v1032
        %v1117 = vpop.f32.mrb[0].mxu0
        %v1118 = vadd.f32 0.0, %v1117
        %v1119 = vpop.f32.mrb[0].mxu0
        %v1120 = vpop.f32.mrb[0].mxu0
        %v1121 = vadd.f32 0.0, %v1120
        %v1122 = vpop.f32.mrb[0].mxu0
        %1123 = vmatprep.mubr.bf16.mxu0 0
        %1124 = vmatmul.mubr.bf16.gmra.mrb[0].mxu0 %v1033
        %v1125 = vpop.f32.mrb[0].mxu0
        %v1126 = vadd.f32 0.0, %v1125
        %v1127 = vpop.f32.mrb[0].mxu0
        %v1128 = vpop.f32.mrb[0].mxu0
        %v1129 = vadd.f32 0.0, %v1128
        %v1130 = vpop.f32.mrb[0].mxu0
        %1131 = vmatprep.mubr.bf16.mxu0 0
        %1132 = vmatmul.mubr.bf16.gmra.mrb[0].mxu0 %v1034
        %v1133 = vpop.f32.mrb[0].mxu0
        %v1134 = vadd.f32 0.0, %v1133
        %v1135 = vpop.f32.mrb[0].mxu0
        %v1136 = vpop.f32.mrb[0].mxu0
        %v1137 = vadd.f32 0.0, %v1136
        %v1138 = vpop.f32.mrb[0].mxu0
        %1139 = vdwg.mxu0
        %v1140 = vunpack.c.l.bf16 %v979
        %v1141 = vunpack.c.l.bf16 %v980
        %v1142 = vunpack.c.l.bf16 %v981
        %v1143 = vunpack.c.l.bf16 %v982
        %v1144 = vunpack.c.l.bf16 %v983
        %v1145 = vunpack.c.l.bf16 %v984
        %v1146 = vunpack.c.l.bf16 %v985
        %v1147 = vunpack.c.l.bf16 %v986
        %v1148 = vunpack.c.l.bf16 %v987
        %v1149 = vunpack.c.l.bf16 %v988
        %v1150 = vunpack.c.l.bf16 %v989
        %v1151 = vunpack.c.l.bf16 %v990
        %v1152 = vunpack.c.l.bf16 %v991
        %v1153 = vunpack.c.l.bf16 %v992
        %v1154 = vunpack.c.l.bf16 %v993
        %v1155 = vunpack.c.l.bf16 %v994
        %1156 = vmatprep.subr.mxu0 0.0
        %1157 = vmatpush1.msra.mxu0 %v311
        %1158 = vmatprep.subr.mxu0 0.0
        %1159 = vmatpush1.msra.mxu0 %v312
        %1160 = vmatprep.subr.mxu0 0.0
        %1161 = vmatpush1.msra.mxu0 %v313
        %1162 = vmatprep.subr.mxu0 0.0
        %1163 = vmatpush1.msra.mxu0 %v314
        %1164 = vmatprep.subr.mxu0 0.0
        %1165 = vmatpush1.msra.mxu0 %v315
        %1166 = vmatprep.subr.mxu0 0.0
        %1167 = vmatpush1.msra.mxu0 %v316
        %1168 = vmatprep.subr.mxu0 0.0
        %1169 = vmatpush1.msra.mxu0 %v317
        %1170 = vmatprep.subr.mxu0 0.0
        %1171 = vmatpush1.msra.mxu0 %v318
        %1172 = vmatprep.subr.mxu0 0.0
        %1173 = vmatpush1.msra.mxu0 %v319
        %1174 = vmatprep.subr.mxu0 0.0
        %1175 = vmatpush1.msra.mxu0 %v320
        %1176 = vmatprep.subr.mxu0 0.0
        %1177 = vmatpush1.msra.mxu0 %v321
        %1178 = vmatprep.subr.mxu0 0.0
        %1179 = vmatpush1.msra.mxu0 %v322
        %1180 = vmatprep.subr.mxu0 0.0
        %1181 = vmatpush1.msra.mxu0 %v323
        %1182 = vmatprep.subr.mxu0 0.0
        %1183 = vmatpush1.msra.mxu0 %v324
        %1184 = vmatprep.subr.mxu0 0.0
        %1185 = vmatpush1.msra.mxu0 %v325
        %1186 = vmatprep.subr.mxu0 0.0
        %1187 = vmatpush1.msra.mxu0 %v326
        %1188 = vmatprep.subr.mxu0 0.0
        %1189 = vmatpush1.msra.mxu0 0.0
        %1190 = vmatprep.subr.mxu0 0.0
        %1191 = vmatpush1.msra.mxu0 0.0
        %1192 = vmatprep.subr.mxu0 0.0
        %1193 = vmatpush1.msra.mxu0 0.0
        %1194 = vmatprep.subr.mxu0 0.0
        %1195 = vmatpush1.msra.mxu0 0.0
        %1196 = vmatprep.subr.mxu0 0.0
        %1197 = vmatpush1.msra.mxu0 0.0
        %1198 = vmatprep.subr.mxu0 0.0
        %1199 = vmatpush1.msra.mxu0 0.0
        %1200 = vmatprep.subr.mxu0 0.0
        %1201 = vmatpush1.msra.mxu0 0.0
        %1202 = vmatprep.subr.mxu0 0.0
        %1203 = vmatpush1.msra.mxu0 0.0
        %1204 = vmatprep.subr.mxu0 0.0
        %1205 = vmatpush1.msra.mxu0 0.0
        %1206 = vmatprep.subr.mxu0 0.0
        %1207 = vmatpush1.msra.mxu0 0.0
        %1208 = vmatprep.subr.mxu0 0.0
        %1209 = vmatpush1.msra.mxu0 0.0
        %1210 = vmatprep.subr.mxu0 0.0
        %1211 = vmatpush1.msra.mxu0 0.0
        %1212 = vmatprep.subr.mxu0 0.0
        %1213 = vmatpush1.msra.mxu0 0.0
        %1214 = vmatprep.subr.mxu0 0.0
        %1215 = vmatpush1.msra.mxu0 0.0
        %1216 = vmatprep.subr.mxu0 0.0
        %1217 = vmatpush1.msra.mxu0 0.0
        %1218 = vmatprep.subr.mxu0 0.0
        %1219 = vmatpush1.msra.mxu0 0.0
        %1220 = vmatprep.mubr.f32.mxu0 0.0
        %1221 = vmatmul.mubr.f32.gmra.mrb[0].mxu0 %v1140
        %v1222 = vpop.f32.mrb[0].mxu0
        %v1223 = vadd.f32 0.0, %v1222
        %v1224 = vpop.f32.mrb[0].mxu0
        %1225 = vmatprep.mubr.f32.mxu0 0.0
        %1226 = vmatmul.mubr.f32.gmra.mrb[0].mxu0 %v1141
        %v1227 = vpop.f32.mrb[0].mxu0
        %v1228 = vadd.f32 0.0, %v1227
        %v1229 = vpop.f32.mrb[0].mxu0
        %1230 = vmatprep.mubr.f32.mxu0 0.0
        %1231 = vmatmul.mubr.f32.gmra.mrb[0].mxu0 %v1142
        %v1232 = vpop.f32.mrb[0].mxu0
        %v1233 = vadd.f32 0.0, %v1232
        %v1234 = vpop.f32.mrb[0].mxu0
        %1235 = vmatprep.mubr.f32.mxu0 0.0
        %1236 = vmatmul.mubr.f32.gmra.mrb[0].mxu0 %v1143
        %v1237 = vpop.f32.mrb[0].mxu0
        %v1238 = vadd.f32 0.0, %v1237
        %v1239 = vpop.f32.mrb[0].mxu0
        %1240 = vmatprep.mubr.f32.mxu0 0.0
        %1241 = vmatmul.mubr.f32.gmra.mrb[0].mxu0 %v1144
        %v1242 = vpop.f32.mrb[0].mxu0
        %v1243 = vadd.f32 0.0, %v1242
        %v1244 = vpop.f32.mrb[0].mxu0
        %1245 = vmatprep.mubr.f32.mxu0 0.0
        %1246 = vmatmul.mubr.f32.gmra.mrb[0].mxu0 %v1145
        %v1247 = vpop.f32.mrb[0].mxu0
        %v1248 = vadd.f32 0.0, %v1247
        %v1249 = vpop.f32.mrb[0].mxu0
        %1250 = vmatprep.mubr.f32.mxu0 0.0
        %1251 = vmatmul.mubr.f32.gmra.mrb[0].mxu0 %v1146
        %v1252 = vpop.f32.mrb[0].mxu0
        %v1253 = vadd.f32 0.0, %v1252
        %v1254 = vpop.f32.mrb[0].mxu0
        %1255 = vmatprep.mubr.f32.mxu0 0.0
        %1256 = vmatmul.mubr.f32.gmra.mrb[0].mxu0 %v1147
        %v1257 = vpop.f32.mrb[0].mxu0
        %v1258 = vadd.f32 0.0, %v1257
        %v1259 = vpop.f32.mrb[0].mxu0
        %1260 = vmatprep.mubr.f32.mxu0 0.0
        %1261 = vmatmul.mubr.f32.gmra.mrb[0].mxu0 %v1148
        %v1262 = vpop.f32.mrb[0].mxu0
        %v1263 = vadd.f32 0.0, %v1262
        %v1264 = vpop.f32.mrb[0].mxu0
        %1265 = vmatprep.mubr.f32.mxu0 0.0
        %1266 = vmatmul.mubr.f32.gmra.mrb[0].mxu0 %v1149
        %v1267 = vpop.f32.mrb[0].mxu0
        %v1268 = vadd.f32 0.0, %v1267
        %v1269 = vpop.f32.mrb[0].mxu0
        %1270 = vmatprep.mubr.f32.mxu0 0.0
        %1271 = vmatmul.mubr.f32.gmra.mrb[0].mxu0 %v1150
        %v1272 = vpop.f32.mrb[0].mxu0
        %v1273 = vadd.f32 0.0, %v1272
        %v1274 = vpop.f32.mrb[0].mxu0
        %1275 = vmatprep.mubr.f32.mxu0 0.0
        %1276 = vmatmul.mubr.f32.gmra.mrb[0].mxu0 %v1151
        %v1277 = vpop.f32.mrb[0].mxu0
        %v1278 = vadd.f32 0.0, %v1277
        %v1279 = vpop.f32.mrb[0].mxu0
        %1280 = vmatprep.mubr.f32.mxu0 0.0
        %1281 = vmatmul.mubr.f32.gmra.mrb[0].mxu0 %v1152
        %v1282 = vpop.f32.mrb[0].mxu0
        %v1283 = vadd.f32 0.0, %v1282
        %v1284 = vpop.f32.mrb[0].mxu0
        %1285 = vmatprep.mubr.f32.mxu0 0.0
        %1286 = vmatmul.mubr.f32.gmra.mrb[0].mxu0 %v1153
        %v1287 = vpop.f32.mrb[0].mxu0
        %v1288 = vadd.f32 0.0, %v1287
        %v1289 = vpop.f32.mrb[0].mxu0
        %1290 = vmatprep.mubr.f32.mxu0 0.0
        %1291 = vmatmul.mubr.f32.gmra.mrb[0].mxu0 %v1154
        %v1292 = vpop.f32.mrb[0].mxu0
        %v1293 = vadd.f32 0.0, %v1292
        %v1294 = vpop.f32.mrb[0].mxu0
        %1295 = vmatprep.mubr.f32.mxu0 0.0
        %1296 = vmatmul.mubr.f32.gmra.mrb[0].mxu0 %v1155
        %v1297 = vpop.f32.mrb[0].mxu0
        %v1298 = vadd.f32 0.0, %v1297
        %v1299 = vpop.f32.mrb[0].mxu0
        %1300 = vdwg.mxu0
        %v1301 = vpack.c.bf16 %v1081, %v1078
        %v1302 = vpack.c.bf16 %v1089, %v1086
        %v1303 = vpack.c.bf16 %v1097, %v1094
        %v1304 = vpack.c.bf16 %v1105, %v1102
        %v1305 = vpack.c.bf16 %v1113, %v1110
        %v1306 = vpack.c.bf16 %v1121, %v1118
        %v1307 = vpack.c.bf16 %v1129, %v1126
        %v1308 = vpack.c.bf16 %v1137, %v1134
        %1309 = vmatprep.subr.bf16.mxu0 0
        %1310 = vmatpush1.bf16.msra.mxu0 %v705
        %1311 = vmatprep.subr.bf16.mxu0 0
        %1312 = vmatpush1.bf16.msra.mxu0 %v706
        %1313 = vmatprep.subr.bf16.mxu0 0
        %1314 = vmatpush1.bf16.msra.mxu0 %v707
        %1315 = vmatprep.subr.bf16.mxu0 0
        %1316 = vmatpush1.bf16.msra.mxu0 %v708
        %1317 = vmatprep.subr.bf16.mxu0 0
        %1318 = vmatpush1.bf16.msra.mxu0 %v709
        %1319 = vmatprep.subr.bf16.mxu0 0
        %1320 = vmatpush1.bf16.msra.mxu0 %v710
        %1321 = vmatprep.subr.bf16.mxu0 0
        %1322 = vmatpush1.bf16.msra.mxu0 %v711
        %1323 = vmatprep.subr.bf16.mxu0 0
        %1324 = vmatpush1.bf16.msra.mxu0 %v712
        %1325 = vmatprep.subr.bf16.mxu0 0
        %1326 = vmatpush1.bf16.msra.mxu0 0
        %1327 = vmatprep.subr.bf16.mxu0 0
        %1328 = vmatpush1.bf16.msra.mxu0 0
        %1329 = vmatprep.subr.bf16.mxu0 0
        %1330 = vmatpush1.bf16.msra.mxu0 0
        %1331 = vmatprep.subr.bf16.mxu0 0
        %1332 = vmatpush1.bf16.msra.mxu0 0
        %1333 = vmatprep.subr.bf16.mxu0 0
        %1334 = vmatpush1.bf16.msra.mxu0 0
        %1335 = vmatprep.subr.bf16.mxu0 0
        %1336 = vmatpush1.bf16.msra.mxu0 0
        %1337 = vmatprep.subr.bf16.mxu0 0
        %1338 = vmatpush1.bf16.msra.mxu0 0
        %1339 = vmatprep.subr.bf16.mxu0 0
        %1340 = vmatpush1.bf16.msra.mxu0 0
        %1341 = vmatprep.mubr.bf16.mxu0 0
        %1342 = vmatmul.mubr.bf16.gmra.mrb[0].mxu0 %v1301
        %v1343 = vpop.f32.mrb[0].mxu0
        %v1344 = vadd.f32 0.0, %v1343
        %v1345 = vpop.f32.mrb[0].mxu0
        %v1346 = vpop.f32.mrb[0].mxu0
        %v1347 = vadd.f32 0.0, %v1346
        %v1348 = vpop.f32.mrb[0].mxu0
        %1349 = vmatprep.mubr.bf16.mxu0 0
        %1350 = vmatmul.mubr.bf16.gmra.mrb[0].mxu0 %v1302
        %v1351 = vpop.f32.mrb[0].mxu0
        %v1352 = vadd.f32 0.0, %v1351
        %v1353 = vpop.f32.mrb[0].mxu0
        %v1354 = vpop.f32.mrb[0].mxu0
        %v1355 = vadd.f32 0.0, %v1354
        %v1356 = vpop.f32.mrb[0].mxu0
        %1357 = vmatprep.mubr.bf16.mxu0 0
        %1358 = vmatmul.mubr.bf16.gmra.mrb[0].mxu0 %v1303
        %v1359 = vpop.f32.mrb[0].mxu0
        %v1360 = vadd.f32 0.0, %v1359
        %v1361 = vpop.f32.mrb[0].mxu0
        %v1362 = vpop.f32.mrb[0].mxu0
        %v1363 = vadd.f32 0.0, %v1362
        %v1364 = vpop.f32.mrb[0].mxu0
        %1365 = vmatprep.mubr.bf16.mxu0 0
        %1366 = vmatmul.mubr.bf16.gmra.mrb[0].mxu0 %v1304
        %v1367 = vpop.f32.mrb[0].mxu0
        %v1368 = vadd.f32 0.0, %v1367
        %v1369 = vpop.f32.mrb[0].mxu0
        %v1370 = vpop.f32.mrb[0].mxu0
        %v1371 = vadd.f32 0.0, %v1370
        %v1372 = vpop.f32.mrb[0].mxu0
        %1373 = vmatprep.mubr.bf16.mxu0 0
        %1374 = vmatmul.mubr.bf16.gmra.mrb[0].mxu0 %v1305
        %v1375 = vpop.f32.mrb[0].mxu0
        %v1376 = vadd.f32 0.0, %v1375
        %v1377 = vpop.f32.mrb[0].mxu0
        %v1378 = vpop.f32.mrb[0].mxu0
        %v1379 = vadd.f32 0.0, %v1378
        %v1380 = vpop.f32.mrb[0].mxu0
        %1381 = vmatprep.mubr.bf16.mxu0 0
        %1382 = vmatmul.mubr.bf16.gmra.mrb[0].mxu0 %v1306
        %v1383 = vpop.f32.mrb[0].mxu0
        %v1384 = vadd.f32 0.0, %v1383
        %v1385 = vpop.f32.mrb[0].mxu0
        %v1386 = vpop.f32.mrb[0].mxu0
        %v1387 = vadd.f32 0.0, %v1386
        %v1388 = vpop.f32.mrb[0].mxu0
        %1389 = vmatprep.mubr.bf16.mxu0 0
        %1390 = vmatmul.mubr.bf16.gmra.mrb[0].mxu0 %v1307
        %v1391 = vpop.f32.mrb[0].mxu0
        %v1392 = vadd.f32 0.0, %v1391
        %v1393 = vpop.f32.mrb[0].mxu0
        %v1394 = vpop.f32.mrb[0].mxu0
        %v1395 = vadd.f32 0.0, %v1394
        %v1396 = vpop.f32.mrb[0].mxu0
        %1397 = vmatprep.mubr.bf16.mxu0 0
        %1398 = vmatmul.mubr.bf16.gmra.mrb[0].mxu0 %v1308
        %v1399 = vpop.f32.mrb[0].mxu0
        %v1400 = vadd.f32 0.0, %v1399
        %v1401 = vpop.f32.mrb[0].mxu0
        %v1402 = vpop.f32.mrb[0].mxu0
        %v1403 = vadd.f32 0.0, %v1402
        %v1404 = vpop.f32.mrb[0].mxu0
        %1405 = vdwg.mxu0
        %v1406 = vadd.f32 %v287, %v1344
        %v1407 = vadd.f32 %v288, %v1347
        %v1408 = vadd.f32 %v289, %v1352
        %v1409 = vadd.f32 %v290, %v1355
        %v1410 = vadd.f32 %v291, %v1360
        %v1411 = vadd.f32 %v292, %v1363
        %v1412 = vadd.f32 %v293, %v1368
        %v1413 = vadd.f32 %v294, %v1371
        %v1414 = vadd.f32 %v295, %v1376
        %v1415 = vadd.f32 %v296, %v1379
        %v1416 = vadd.f32 %v297, %v1384
        %v1417 = vadd.f32 %v298, %v1387
        %v1418 = vadd.f32 %v299, %v1392
        %v1419 = vadd.f32 %v300, %v1395
        %v1420 = vadd.f32 %v301, %v1400
        %v1421 = vadd.f32 %v302, %v1403
        %v1422 = vxor.u32 %v1406, 2147483648
        %v1423 = vxor.u32 %v1407, 2147483648
        %v1424 = vxor.u32 %v1408, 2147483648
        %v1425 = vxor.u32 %v1409, 2147483648
        %v1426 = vxor.u32 %v1410, 2147483648
        %v1427 = vxor.u32 %v1411, 2147483648
        %v1428 = vxor.u32 %v1412, 2147483648
        %v1429 = vxor.u32 %v1413, 2147483648
        %v1430 = vxor.u32 %v1414, 2147483648
        %v1431 = vxor.u32 %v1415, 2147483648
        %v1432 = vxor.u32 %v1416, 2147483648
        %v1433 = vxor.u32 %v1417, 2147483648
        %v1434 = vxor.u32 %v1418, 2147483648
        %v1435 = vxor.u32 %v1419, 2147483648
        %v1436 = vxor.u32 %v1420, 2147483648
        %v1437 = vxor.u32 %v1421, 2147483648
        %v1438 = vmul.f32 %v1422, 1.442695
        %v1439 = vpow.pop %v1438
        %v1440 = vmul.f32 %v1423, 1.442695
        %v1441 = vpow.pop %v1440
        %v1442 = vmul.f32 %v1424, 1.442695
        %v1443 = vpow.pop %v1442
        %v1444 = vmul.f32 %v1425, 1.442695
        %v1445 = vpow.pop %v1444
        %v1446 = vmul.f32 %v1426, 1.442695
        %v1447 = vpow.pop %v1446
        %v1448 = vmul.f32 %v1427, 1.442695
        %v1449 = vpow.pop %v1448
        %v1450 = vmul.f32 %v1428, 1.442695
        %v1451 = vpow.pop %v1450
        %v1452 = vmul.f32 %v1429, 1.442695
        %v1453 = vpow.pop %v1452
        %v1454 = vmul.f32 %v1430, 1.442695
        %v1455 = vpow.pop %v1454
        %v1456 = vmul.f32 %v1431, 1.442695
        %v1457 = vpow.pop %v1456
        %v1458 = vmul.f32 %v1432, 1.442695
        %v1459 = vpow.pop %v1458
        %v1460 = vmul.f32 %v1433, 1.442695
        %v1461 = vpow.pop %v1460
        %v1462 = vmul.f32 %v1434, 1.442695
        %v1463 = vpow.pop %v1462
        %v1464 = vmul.f32 %v1435, 1.442695
        %v1465 = vpow.pop %v1464
        %v1466 = vmul.f32 %v1436, 1.442695
        %v1467 = vpow.pop %v1466
        %v1468 = vmul.f32 %v1437, 1.442695
        %v1469 = vpow.pop %v1468
        %v1470 = vadd.f32 %v1439, 1.0
        %v1471 = vadd.f32 %v1441, 1.0
        %v1472 = vadd.f32 %v1443, 1.0
        %v1473 = vadd.f32 %v1445, 1.0
        %v1474 = vadd.f32 %v1447, 1.0
        %v1475 = vadd.f32 %v1449, 1.0
        %v1476 = vadd.f32 %v1451, 1.0
        %v1477 = vadd.f32 %v1453, 1.0
        %v1478 = vadd.f32 %v1455, 1.0
        %v1479 = vadd.f32 %v1457, 1.0
        %v1480 = vadd.f32 %v1459, 1.0
        %v1481 = vadd.f32 %v1461, 1.0
        %v1482 = vadd.f32 %v1463, 1.0
        %v1483 = vadd.f32 %v1465, 1.0
        %v1484 = vadd.f32 %v1467, 1.0
        %v1485 = vadd.f32 %v1469, 1.0
        %v1486 = vrcp.pop %v1470
        %v1487 = vmul.f32 1.0, %v1486
        %v1488 = vrcp.pop %v1471
        %v1489 = vmul.f32 1.0, %v1488
        %v1490 = vrcp.pop %v1472
        %v1491 = vmul.f32 1.0, %v1490
        %v1492 = vrcp.pop %v1473
        %v1493 = vmul.f32 1.0, %v1492
        %v1494 = vrcp.pop %v1474
        %v1495 = vmul.f32 1.0, %v1494
        %v1496 = vrcp.pop %v1475
        %v1497 = vmul.f32 1.0, %v1496
        %v1498 = vrcp.pop %v1476
        %v1499 = vmul.f32 1.0, %v1498
        %v1500 = vrcp.pop %v1477
        %v1501 = vmul.f32 1.0, %v1500
        %v1502 = vrcp.pop %v1478
        %v1503 = vmul.f32 1.0, %v1502
        %v1504 = vrcp.pop %v1479
        %v1505 = vmul.f32 1.0, %v1504
        %v1506 = vrcp.pop %v1480
        %v1507 = vmul.f32 1.0, %v1506
        %v1508 = vrcp.pop %v1481
        %v1509 = vmul.f32 1.0, %v1508
        %v1510 = vrcp.pop %v1482
        %v1511 = vmul.f32 1.0, %v1510
        %v1512 = vrcp.pop %v1483
        %v1513 = vmul.f32 1.0, %v1512
        %v1514 = vrcp.pop %v1484
        %v1515 = vmul.f32 1.0, %v1514
        %v1516 = vrcp.pop %v1485
        %v1517 = vmul.f32 1.0, %v1516
        %v1518 = vadd.f32 %v930, %v1078
        %v1519 = vadd.f32 %v931, %v1081
        %v1520 = vadd.f32 %v932, %v1086
        %v1521 = vadd.f32 %v933, %v1089
        %v1522 = vadd.f32 %v934, %v1094
        %v1523 = vadd.f32 %v935, %v1097
        %v1524 = vadd.f32 %v936, %v1102
        %v1525 = vadd.f32 %v937, %v1105
        %v1526 = vadd.f32 %v938, %v1110
        %v1527 = vadd.f32 %v939, %v1113
        %v1528 = vadd.f32 %v940, %v1118
        %v1529 = vadd.f32 %v941, %v1121
        %v1530 = vadd.f32 %v942, %v1126
        %v1531 = vadd.f32 %v943, %v1129
        %v1532 = vadd.f32 %v944, %v1134
        %v1533 = vadd.f32 %v945, %v1137
        %v1534 = vmul.f32 %v1487, %v1223
        %v1535 = vmul.f32 %v1489, %v1228
        %v1536 = vmul.f32 %v1491, %v1233
        %v1537 = vmul.f32 %v1493, %v1238
        %v1538 = vmul.f32 %v1495, %v1243
        %v1539 = vmul.f32 %v1497, %v1248
        %v1540 = vmul.f32 %v1499, %v1253
        %v1541 = vmul.f32 %v1501, %v1258
        %v1542 = vmul.f32 %v1503, %v1263
        %v1543 = vmul.f32 %v1505, %v1268
        %v1544 = vmul.f32 %v1507, %v1273
        %v1545 = vmul.f32 %v1509, %v1278
        %v1546 = vmul.f32 %v1511, %v1283
        %v1547 = vmul.f32 %v1513, %v1288
        %v1548 = vmul.f32 %v1515, %v1293
        %v1549 = vmul.f32 %v1517, %v1298
        %v1550 = vadd.f32 %v962, %v1534
        %v1551 = vadd.f32 %v963, %v1535
        %v1552 = vadd.f32 %v964, %v1536
        %v1553 = vadd.f32 %v965, %v1537
        %v1554 = vadd.f32 %v966, %v1538
        %v1555 = vadd.f32 %v967, %v1539
        %v1556 = vadd.f32 %v968, %v1540
        %v1557 = vadd.f32 %v969, %v1541
        %v1558 = vadd.f32 %v970, %v1542
        %v1559 = vadd.f32 %v971, %v1543
        %v1560 = vadd.f32 %v972, %v1544
        %v1561 = vadd.f32 %v973, %v1545
        %v1562 = vadd.f32 %v974, %v1546
        %v1563 = vadd.f32 %v975, %v1547
        %v1564 = vadd.f32 %v976, %v1548
        %v1565 = vadd.f32 %v977, %v1549
        %v1566 = vld [vmem:[%s248] sm:$0xff]
        %v1567 = vld [vmem:[%s248 + $0x8] sm:$0xff]
        %v1568 = vld [vmem:[%s248 + $0x10] sm:$0xff]
        %v1569 = vld [vmem:[%s248 + $0x20] sm:$0xff]
        %v1570 = vld [vmem:[%s248 + $0x28] sm:$0xff]
        %v1571 = vld [vmem:[%s248 + $0x30] sm:$0xff]
        %v1572 = vld [vmem:[%s248 + $0x40] sm:$0xff]
        %v1573 = vld [vmem:[%s248 + $0x48] sm:$0xff]
        %v1574 = vld [vmem:[%s248 + $0x50] sm:$0xff]
        %v1575 = vld [vmem:[%s248 + $0x60] sm:$0xff]
        %v1576 = vld [vmem:[%s248 + $0x68] sm:$0xff]
        %v1577 = vld [vmem:[%s248 + $0x70] sm:$0xff]
        %v1578 = vld [vmem:[%s248 + $0x80] sm:$0xff]
        %v1579 = vld [vmem:[%s248 + $0x88] sm:$0xff]
        %v1580 = vld [vmem:[%s248 + $0x90] sm:$0xff]
        %v1581 = vld [vmem:[%s248 + $0xa0] sm:$0xff]
        %v1582 = vld [vmem:[%s248 + $0xa8] sm:$0xff]
        %v1583 = vld [vmem:[%s248 + $0xb0] sm:$0xff]
        %v1584 = vld [vmem:[%s248 + $0xc0] sm:$0xff]
        %v1585 = vld [vmem:[%s248 + $0xc8] sm:$0xff]
        %v1586 = vld [vmem:[%s248 + $0xd0] sm:$0xff]
        %v1587 = vld [vmem:[%s248 + $0xe0] sm:$0xff]
        %v1588 = vld [vmem:[%s248 + $0xe8] sm:$0xff]
        %v1589 = vld [vmem:[%s248 + $0xf0] sm:$0xff]
        %v1590 = vld [vmem:[%s248 + $0x100] sm:$0xff]
        %v1591 = vld [vmem:[%s248 + $0x108] sm:$0xff]
        %v1592 = vld [vmem:[%s248 + $0x110] sm:$0xff]
        %v1593 = vld [vmem:[%s248 + $0x120] sm:$0xff]
        %v1594 = vld [vmem:[%s248 + $0x128] sm:$0xff]
        %v1595 = vld [vmem:[%s248 + $0x130] sm:$0xff]
        %v1596 = vld [vmem:[%s248 + $0x140] sm:$0xff]
        %v1597 = vld [vmem:[%s248 + $0x148] sm:$0xff]
        %v1598 = vld [vmem:[%s248 + $0x150] sm:$0xff]
        %v1599 = vld [vmem:[%s248 + $0x160] sm:$0xff]
        %v1600 = vld [vmem:[%s248 + $0x168] sm:$0xff]
        %v1601 = vld [vmem:[%s248 + $0x170] sm:$0xff]
        %v1602 = vld [vmem:[%s248 + $0x180] sm:$0xff]
        %v1603 = vld [vmem:[%s248 + $0x188] sm:$0xff]
        %v1604 = vld [vmem:[%s248 + $0x190] sm:$0xff]
        %v1605 = vld [vmem:[%s248 + $0x1a0] sm:$0xff]
        %v1606 = vld [vmem:[%s248 + $0x1a8] sm:$0xff]
        %v1607 = vld [vmem:[%s248 + $0x1b0] sm:$0xff]
        %v1608 = vld [vmem:[%s248 + $0x1c0] sm:$0xff]
        %v1609 = vld [vmem:[%s248 + $0x1c8] sm:$0xff]
        %v1610 = vld [vmem:[%s248 + $0x1d0] sm:$0xff]
        %v1611 = vld [vmem:[%s248 + $0x1e0] sm:$0xff]
        %v1612 = vld [vmem:[%s248 + $0x1e8] sm:$0xff]
        %v1613 = vld [vmem:[%s248 + $0x1f0] sm:$0xff]
        %v1614 = vpack.c.bf16 %v1519, %v1518
        %v1615 = vpack.c.bf16 %v1521, %v1520
        %v1616 = vpack.c.bf16 %v1523, %v1522
        %v1617 = vpack.c.bf16 %v1525, %v1524
        %v1618 = vpack.c.bf16 %v1527, %v1526
        %v1619 = vpack.c.bf16 %v1529, %v1528
        %v1620 = vpack.c.bf16 %v1531, %v1530
        %v1621 = vpack.c.bf16 %v1533, %v1532
        %v1622 = vld [vmem:[%s2] sm:$0xff]
        %v1623 = vld [vmem:[%s2 + $0x8] sm:$0xf]
        %v1624 = vld [vmem:[%s2 + $0xc] sm:$0xff]
        %v1625 = vld [vmem:[%s2 + $0x14] sm:$0xf]
        %v1626 = vld [vmem:[%s2 + $0x18] sm:$0xff]
        %v1627 = vld [vmem:[%s2 + $0x20] sm:$0xf]
        %v1628 = vld [vmem:[%s2 + $0x24] sm:$0xff]
        %v1629 = vld [vmem:[%s2 + $0x2c] sm:$0xf]
        %v1630 = vld [vmem:[%s2 + $0x30] sm:$0xff]
        %v1631 = vld [vmem:[%s2 + $0x38] sm:$0xf]
        %v1632 = vld [vmem:[%s2 + $0x3c] sm:$0xff]
        %v1633 = vld [vmem:[%s2 + $0x44] sm:$0xf]
        %v1634 = vld [vmem:[%s2 + $0x48] sm:$0xff]
        %v1635 = vld [vmem:[%s2 + $0x50] sm:$0xf]
        %v1636 = vld [vmem:[%s2 + $0x54] sm:$0xff]
        %v1637 = vld [vmem:[%s2 + $0x5c] sm:$0xf]
        %v1638 = vld [vmem:[%s2 + $0x60] sm:$0xff]
        %v1639 = vld [vmem:[%s2 + $0x68] sm:$0xf]
        %v1640 = vld [vmem:[%s2 + $0x6c] sm:$0xff]
        %v1641 = vld [vmem:[%s2 + $0x74] sm:$0xf]
        %v1642 = vld [vmem:[%s2 + $0x78] sm:$0xff]
        %v1643 = vld [vmem:[%s2 + $0x80] sm:$0xf]
        %v1644 = vld [vmem:[%s2 + $0x84] sm:$0xff]
        %v1645 = vld [vmem:[%s2 + $0x8c] sm:$0xf]
        %v1646 = vld [vmem:[%s2 + $0x90] sm:$0xff]
        %v1647 = vld [vmem:[%s2 + $0x98] sm:$0xf]
        %v1648 = vld [vmem:[%s2 + $0x9c] sm:$0xff]
        %v1649 = vld [vmem:[%s2 + $0xa4] sm:$0xf]
        %v1650 = vld [vmem:[%s2 + $0xa8] sm:$0xff]
        %v1651 = vld [vmem:[%s2 + $0xb0] sm:$0xf]
        %v1652 = vld [vmem:[%s2 + $0xb4] sm:$0xff]
        %v1653 = vld [vmem:[%s2 + $0xbc] sm:$0xf]
        %v1686 = vunpack.c.l.b16 %v1622
        %v1687 = vunpack.c.h.b16 %v1622
        %v1688 = vunpack.c.l.b16 %v1623
        %v1689 = vunpack.c.l.b16 %v1624
        %v1690 = vunpack.c.h.b16 %v1624
        %v1691 = vunpack.c.l.b16 %v1625
        %v1692 = vunpack.c.l.b16 %v1626
        %v1693 = vunpack.c.h.b16 %v1626
        %v1694 = vunpack.c.l.b16 %v1627
        %v1695 = vunpack.c.l.b16 %v1628
        %v1696 = vunpack.c.h.b16 %v1628
        %v1697 = vunpack.c.l.b16 %v1629
        %v1698 = vunpack.c.l.b16 %v1630
        %v1699 = vunpack.c.h.b16 %v1630
        %v1700 = vunpack.c.l.b16 %v1631
        %v1701 = vunpack.c.l.b16 %v1632
        %v1702 = vunpack.c.h.b16 %v1632
        %v1703 = vunpack.c.l.b16 %v1633
        %v1704 = vunpack.c.l.b16 %v1634
        %v1705 = vunpack.c.h.b16 %v1634
        %v1706 = vunpack.c.l.b16 %v1635
        %v1707 = vunpack.c.l.b16 %v1636
        %v1708 = vunpack.c.h.b16 %v1636
        %v1709 = vunpack.c.l.b16 %v1637
        %v1710 = vunpack.c.l.b16 %v1638
        %v1711 = vunpack.c.h.b16 %v1638
        %v1712 = vunpack.c.l.b16 %v1639
        %v1713 = vunpack.c.l.b16 %v1640
        %v1714 = vunpack.c.h.b16 %v1640
        %v1715 = vunpack.c.l.b16 %v1641
        %v1716 = vunpack.c.l.b16 %v1642
        %v1717 = vunpack.c.h.b16 %v1642
        %v1718 = vunpack.c.l.b16 %v1643
        %v1719 = vunpack.c.l.b16 %v1644
        %v1720 = vunpack.c.h.b16 %v1644
        %v1721 = vunpack.c.l.b16 %v1645
        %v1722 = vunpack.c.l.b16 %v1646
        %v1723 = vunpack.c.h.b16 %v1646
        %v1724 = vunpack.c.l.b16 %v1647
        %v1725 = vunpack.c.l.b16 %v1648
        %v1726 = vunpack.c.h.b16 %v1648
        %v1727 = vunpack.c.l.b16 %v1649
        %v1728 = vunpack.c.l.b16 %v1650
        %v1729 = vunpack.c.h.b16 %v1650
        %v1730 = vunpack.c.l.b16 %v1651
        %v1731 = vunpack.c.l.b16 %v1652
        %v1732 = vunpack.c.h.b16 %v1652
        %v1733 = vunpack.c.l.b16 %v1653
        %v1734 = vpack.c.b16 %v1689, %v1686
        %v1735 = vpack.c.b16 %v1690, %v1687
        %v1736 = vpack.c.b16 %v1691, %v1688
        %v1737 = vpack.c.b16 %v1695, %v1692
        %v1738 = vpack.c.b16 %v1696, %v1693
        %v1739 = vpack.c.b16 %v1697, %v1694
        %v1740 = vpack.c.b16 %v1701, %v1698
        %v1741 = vpack.c.b16 %v1702, %v1699
        %v1742 = vpack.c.b16 %v1703, %v1700
        %v1743 = vpack.c.b16 %v1707, %v1704
        %v1744 = vpack.c.b16 %v1708, %v1705
        %v1745 = vpack.c.b16 %v1709, %v1706
        %v1746 = vpack.c.b16 %v1713, %v1710
        %v1747 = vpack.c.b16 %v1714, %v1711
        %v1748 = vpack.c.b16 %v1715, %v1712
        %v1749 = vpack.c.b16 %v1719, %v1716
        %v1750 = vpack.c.b16 %v1720, %v1717
        %v1751 = vpack.c.b16 %v1721, %v1718
        %v1752 = vpack.c.b16 %v1725, %v1722
        %v1753 = vpack.c.b16 %v1726, %v1723
        %v1754 = vpack.c.b16 %v1727, %v1724
        %v1755 = vpack.c.b16 %v1731, %v1728
        %v1756 = vpack.c.b16 %v1732, %v1729
        %v1757 = vpack.c.b16 %v1733, %v1730
        %1782 = vmatprep.subr.bf16.mxu0 %v1735
        %1783 = vmatpush1.bf16.msra.mxu0 %v1734
        %1784 = vmatprep.subr.bf16.mxu0 %v1738
        %1785 = vmatpush1.bf16.msra.mxu0 %v1737
        %1786 = vmatprep.subr.bf16.mxu0 %v1741
        %1787 = vmatpush1.bf16.msra.mxu0 %v1740
        %1788 = vmatprep.subr.bf16.mxu0 %v1744
        %1789 = vmatpush1.bf16.msra.mxu0 %v1743
        %1790 = vmatprep.subr.bf16.mxu0 %v1747
        %1791 = vmatpush1.bf16.msra.mxu0 %v1746
        %1792 = vmatprep.subr.bf16.mxu0 %v1750
        %1793 = vmatpush1.bf16.msra.mxu0 %v1749
        %1794 = vmatprep.subr.bf16.mxu0 %v1753
        %1795 = vmatpush1.bf16.msra.mxu0 %v1752
        %1796 = vmatprep.subr.bf16.mxu0 %v1756
        %1797 = vmatpush1.bf16.msra.mxu0 %v1755
        %1798 = vmatprep.subr.bf16.mxu0 0
        %1799 = vmatpush1.bf16.msra.mxu0 0
        %1800 = vmatprep.subr.bf16.mxu0 0
        %1801 = vmatpush1.bf16.msra.mxu0 0
        %1802 = vmatprep.subr.bf16.mxu0 0
        %1803 = vmatpush1.bf16.msra.mxu0 0
        %1804 = vmatprep.subr.bf16.mxu0 0
        %1805 = vmatpush1.bf16.msra.mxu0 0
        %1806 = vmatprep.subr.bf16.mxu0 0
        %1807 = vmatpush1.bf16.msra.mxu0 0
        %1808 = vmatprep.subr.bf16.mxu0 0
        %1809 = vmatpush1.bf16.msra.mxu0 0
        %1810 = vmatprep.subr.bf16.mxu0 0
        %1811 = vmatpush1.bf16.msra.mxu0 0
        %1812 = vmatprep.subr.bf16.mxu0 0
        %1813 = vmatpush1.bf16.msra.mxu0 0
        %1814 = vmatprep.mubr.bf16.mxu0 0
        %1815 = vmatmul.mubr.bf16.gmra.mrb[0].mxu0 %v1614
        %v1816 = vpop.f32.mrb[0].mxu0
        %v1817 = vadd.f32 0.0, %v1816
        %v1818 = vpop.f32.mrb[0].mxu0
        %v1819 = vadd.f32 0.0, %v1818
        %v1820 = vpop.f32.mrb[0].mxu0
        %v1821 = vadd.f32 0.0, %v1820
        %v1822 = vpop.f32.mrb[0].mxu0
        %v1823 = vadd.f32 0.0, %v1822
        %1824 = vmatprep.mubr.bf16.mxu0 0
        %1825 = vmatmul.mubr.bf16.gmra.mrb[0].mxu0 %v1615
        %v1826 = vpop.f32.mrb[0].mxu0
        %v1827 = vadd.f32 0.0, %v1826
        %v1828 = vpop.f32.mrb[0].mxu0
        %v1829 = vadd.f32 0.0, %v1828
        %v1830 = vpop.f32.mrb[0].mxu0
        %v1831 = vadd.f32 0.0, %v1830
        %v1832 = vpop.f32.mrb[0].mxu0
        %v1833 = vadd.f32 0.0, %v1832
        %1834 = vmatprep.mubr.bf16.mxu0 0
        %1835 = vmatmul.mubr.bf16.gmra.mrb[0].mxu0 %v1616
        %v1836 = vpop.f32.mrb[0].mxu0
        %v1837 = vadd.f32 0.0, %v1836
        %v1838 = vpop.f32.mrb[0].mxu0
        %v1839 = vadd.f32 0.0, %v1838
        %v1840 = vpop.f32.mrb[0].mxu0
        %v1841 = vadd.f32 0.0, %v1840
        %v1842 = vpop.f32.mrb[0].mxu0
        %v1843 = vadd.f32 0.0, %v1842
        %1844 = vmatprep.mubr.bf16.mxu0 0
        %1845 = vmatmul.mubr.bf16.gmra.mrb[0].mxu0 %v1617
        %v1846 = vpop.f32.mrb[0].mxu0
        %v1847 = vadd.f32 0.0, %v1846
        %v1848 = vpop.f32.mrb[0].mxu0
        %v1849 = vadd.f32 0.0, %v1848
        %v1850 = vpop.f32.mrb[0].mxu0
        %v1851 = vadd.f32 0.0, %v1850
        %v1852 = vpop.f32.mrb[0].mxu0
        %v1853 = vadd.f32 0.0, %v1852
        %1854 = vmatprep.mubr.bf16.mxu0 0
        %1855 = vmatmul.mubr.bf16.gmra.mrb[0].mxu0 %v1618
        %v1856 = vpop.f32.mrb[0].mxu0
        %v1857 = vadd.f32 0.0, %v1856
        %v1858 = vpop.f32.mrb[0].mxu0
        %v1859 = vadd.f32 0.0, %v1858
        %v1860 = vpop.f32.mrb[0].mxu0
        %v1861 = vadd.f32 0.0, %v1860
        %v1862 = vpop.f32.mrb[0].mxu0
        %v1863 = vadd.f32 0.0, %v1862
        %1864 = vmatprep.mubr.bf16.mxu0 0
        %1865 = vmatmul.mubr.bf16.gmra.mrb[0].mxu0 %v1619
        %v1866 = vpop.f32.mrb[0].mxu0
        %v1867 = vadd.f32 0.0, %v1866
        %v1868 = vpop.f32.mrb[0].mxu0
        %v1869 = vadd.f32 0.0, %v1868
        %v1870 = vpop.f32.mrb[0].mxu0
        %v1871 = vadd.f32 0.0, %v1870
        %v1872 = vpop.f32.mrb[0].mxu0
        %v1873 = vadd.f32 0.0, %v1872
        %1874 = vmatprep.mubr.bf16.mxu0 0
        %1875 = vmatmul.mubr.bf16.gmra.mrb[0].mxu0 %v1620
        %v1876 = vpop.f32.mrb[0].mxu0
        %v1877 = vadd.f32 0.0, %v1876
        %v1878 = vpop.f32.mrb[0].mxu0
        %v1879 = vadd.f32 0.0, %v1878
        %v1880 = vpop.f32.mrb[0].mxu0
        %v1881 = vadd.f32 0.0, %v1880
        %v1882 = vpop.f32.mrb[0].mxu0
        %v1883 = vadd.f32 0.0, %v1882
        %1884 = vmatprep.mubr.bf16.mxu0 0
        %1885 = vmatmul.mubr.bf16.gmra.mrb[0].mxu0 %v1621
        %v1886 = vpop.f32.mrb[0].mxu0
        %v1887 = vadd.f32 0.0, %v1886
        %v1888 = vpop.f32.mrb[0].mxu0
        %v1889 = vadd.f32 0.0, %v1888
        %v1890 = vpop.f32.mrb[0].mxu0
        %v1891 = vadd.f32 0.0, %v1890
        %v1892 = vpop.f32.mrb[0].mxu0
        %v1893 = vadd.f32 0.0, %v1892
        %1894 = vdwg.mxu0
        %1895 = vmatprep.subr.bf16.mxu0 0
        %1896 = vmatpush1.bf16.msra.mxu0 %v1736
        %1897 = vmatprep.subr.bf16.mxu0 0
        %1898 = vmatpush1.bf16.msra.mxu0 %v1739
        %1899 = vmatprep.subr.bf16.mxu0 0
        %1900 = vmatpush1.bf16.msra.mxu0 %v1742
        %1901 = vmatprep.subr.bf16.mxu0 0
        %1902 = vmatpush1.bf16.msra.mxu0 %v1745
        %1903 = vmatprep.subr.bf16.mxu0 0
        %1904 = vmatpush1.bf16.msra.mxu0 %v1748
        %1905 = vmatprep.subr.bf16.mxu0 0
        %1906 = vmatpush1.bf16.msra.mxu0 %v1751
        %1907 = vmatprep.subr.bf16.mxu0 0
        %1908 = vmatpush1.bf16.msra.mxu0 %v1754
        %1909 = vmatprep.subr.bf16.mxu0 0
        %1910 = vmatpush1.bf16.msra.mxu0 %v1757
        %1911 = vmatprep.subr.bf16.mxu0 0
        %1912 = vmatpush1.bf16.msra.mxu0 0
        %1913 = vmatprep.subr.bf16.mxu0 0
        %1914 = vmatpush1.bf16.msra.mxu0 0
        %1915 = vmatprep.subr.bf16.mxu0 0
        %1916 = vmatpush1.bf16.msra.mxu0 0
        %1917 = vmatprep.subr.bf16.mxu0 0
        %1918 = vmatpush1.bf16.msra.mxu0 0
        %1919 = vmatprep.subr.bf16.mxu0 0
        %1920 = vmatpush1.bf16.msra.mxu0 0
        %1921 = vmatprep.subr.bf16.mxu0 0
        %1922 = vmatpush1.bf16.msra.mxu0 0
        %1923 = vmatprep.subr.bf16.mxu0 0
        %1924 = vmatpush1.bf16.msra.mxu0 0
        %1925 = vmatprep.subr.bf16.mxu0 0
        %1926 = vmatpush1.bf16.msra.mxu0 0
        %1927 = vmatprep.mubr.bf16.mxu0 0
        %1928 = vmatmul.mubr.bf16.gmra.mrb[0].mxu0 %v1614
        %v1929 = vpop.f32.mrb[0].mxu0
        %v1930 = vadd.f32 0.0, %v1929
        %v1931 = vpop.f32.mrb[0].mxu0
        %v1932 = vpop.f32.mrb[0].mxu0
        %v1933 = vadd.f32 0.0, %v1932
        %v1934 = vpop.f32.mrb[0].mxu0
        %1935 = vmatprep.mubr.bf16.mxu0 0
        %1936 = vmatmul.mubr.bf16.gmra.mrb[0].mxu0 %v1615
        %v1937 = vpop.f32.mrb[0].mxu0
        %v1938 = vadd.f32 0.0, %v1937
        %v1939 = vpop.f32.mrb[0].mxu0
        %v1940 = vpop.f32.mrb[0].mxu0
        %v1941 = vadd.f32 0.0, %v1940
        %v1942 = vpop.f32.mrb[0].mxu0
        %1943 = vmatprep.mubr.bf16.mxu0 0
        %1944 = vmatmul.mubr.bf16.gmra.mrb[0].mxu0 %v1616
        %v1945 = vpop.f32.mrb[0].mxu0
        %v1946 = vadd.f32 0.0, %v1945
        %v1947 = vpop.f32.mrb[0].mxu0
        %v1948 = vpop.f32.mrb[0].mxu0
        %v1949 = vadd.f32 0.0, %v1948
        %v1950 = vpop.f32.mrb[0].mxu0
        %1951 = vmatprep.mubr.bf16.mxu0 0
        %1952 = vmatmul.mubr.bf16.gmra.mrb[0].mxu0 %v1617
        %v1953 = vpop.f32.mrb[0].mxu0
        %v1954 = vadd.f32 0.0, %v1953
        %v1955 = vpop.f32.mrb[0].mxu0
        %v1956 = vpop.f32.mrb[0].mxu0
        %v1957 = vadd.f32 0.0, %v1956
        %v1958 = vpop.f32.mrb[0].mxu0
        %1959 = vmatprep.mubr.bf16.mxu0 0
        %1960 = vmatmul.mubr.bf16.gmra.mrb[0].mxu0 %v1618
        %v1961 = vpop.f32.mrb[0].mxu0
        %v1962 = vadd.f32 0.0, %v1961
        %v1963 = vpop.f32.mrb[0].mxu0
        %v1964 = vpop.f32.mrb[0].mxu0
        %v1965 = vadd.f32 0.0, %v1964
        %v1966 = vpop.f32.mrb[0].mxu0
        %1967 = vmatprep.mubr.bf16.mxu0 0
        %1968 = vmatmul.mubr.bf16.gmra.mrb[0].mxu0 %v1619
        %v1969 = vpop.f32.mrb[0].mxu0
        %v1970 = vadd.f32 0.0, %v1969
        %v1971 = vpop.f32.mrb[0].mxu0
        %v1972 = vpop.f32.mrb[0].mxu0
        %v1973 = vadd.f32 0.0, %v1972
        %v1974 = vpop.f32.mrb[0].mxu0
        %1975 = vmatprep.mubr.bf16.mxu0 0
        %1976 = vmatmul.mubr.bf16.gmra.mrb[0].mxu0 %v1620
        %v1977 = vpop.f32.mrb[0].mxu0
        %v1978 = vadd.f32 0.0, %v1977
        %v1979 = vpop.f32.mrb[0].mxu0
        %v1980 = vpop.f32.mrb[0].mxu0
        %v1981 = vadd.f32 0.0, %v1980
        %v1982 = vpop.f32.mrb[0].mxu0
        %1983 = vmatprep.mubr.bf16.mxu0 0
        %1984 = vmatmul.mubr.bf16.gmra.mrb[0].mxu0 %v1621
        %v1985 = vpop.f32.mrb[0].mxu0
        %v1986 = vadd.f32 0.0, %v1985
        %v1987 = vpop.f32.mrb[0].mxu0
        %v1988 = vpop.f32.mrb[0].mxu0
        %v1989 = vadd.f32 0.0, %v1988
        %v1990 = vpop.f32.mrb[0].mxu0
        %1991 = vdwg.mxu0
        %v1992 = vadd.f32 %v1566, %v1817
        %v1993 = vadd.f32 %v1567, %v1819
        %v1994 = vadd.f32 %v1568, %v1930
        %v1995 = vadd.f32 %v1569, %v1821
        %v1996 = vadd.f32 %v1570, %v1823
        %v1997 = vadd.f32 %v1571, %v1933
        %v1998 = vadd.f32 %v1572, %v1827
        %v1999 = vadd.f32 %v1573, %v1829
        %v2000 = vadd.f32 %v1574, %v1938
        %v2001 = vadd.f32 %v1575, %v1831
        %v2002 = vadd.f32 %v1576, %v1833
        %v2003 = vadd.f32 %v1577, %v1941
        %v2004 = vadd.f32 %v1578, %v1837
        %v2005 = vadd.f32 %v1579, %v1839
        %v2006 = vadd.f32 %v1580, %v1946
        %v2007 = vadd.f32 %v1581, %v1841
        %v2008 = vadd.f32 %v1582, %v1843
        %v2009 = vadd.f32 %v1583, %v1949
        %v2010 = vadd.f32 %v1584, %v1847
        %v2011 = vadd.f32 %v1585, %v1849
        %v2012 = vadd.f32 %v1586, %v1954
        %v2013 = vadd.f32 %v1587, %v1851
        %v2014 = vadd.f32 %v1588, %v1853
        %v2015 = vadd.f32 %v1589, %v1957
        %v2016 = vadd.f32 %v1590, %v1857
        %v2017 = vadd.f32 %v1591, %v1859
        %v2018 = vadd.f32 %v1592, %v1962
        %v2019 = vadd.f32 %v1593, %v1861
        %v2020 = vadd.f32 %v1594, %v1863
        %v2021 = vadd.f32 %v1595, %v1965
        %v2022 = vadd.f32 %v1596, %v1867
        %v2023 = vadd.f32 %v1597, %v1869
        %v2024 = vadd.f32 %v1598, %v1970
        %v2025 = vadd.f32 %v1599, %v1871
        %v2026 = vadd.f32 %v1600, %v1873
        %v2027 = vadd.f32 %v1601, %v1973
        %v2028 = vadd.f32 %v1602, %v1877
        %v2029 = vadd.f32 %v1603, %v1879
        %v2030 = vadd.f32 %v1604, %v1978
        %v2031 = vadd.f32 %v1605, %v1881
        %v2032 = vadd.f32 %v1606, %v1883
        %v2033 = vadd.f32 %v1607, %v1981
        %v2034 = vadd.f32 %v1608, %v1887
        %v2035 = vadd.f32 %v1609, %v1889
        %v2036 = vadd.f32 %v1610, %v1986
        %v2037 = vadd.f32 %v1611, %v1891
        %v2038 = vadd.f32 %v1612, %v1893
        %v2039 = vadd.f32 %v1613, %v1989
        %v2040 = vxor.u32 %v1992, 2147483648
        %v2041 = vxor.u32 %v1995, 2147483648
        %v2042 = vxor.u32 %v1998, 2147483648
        %v2043 = vxor.u32 %v2001, 2147483648
        %v2044 = vxor.u32 %v2004, 2147483648
        %v2045 = vxor.u32 %v2007, 2147483648
        %v2046 = vxor.u32 %v2010, 2147483648
        %v2047 = vxor.u32 %v2013, 2147483648
        %v2048 = vxor.u32 %v2016, 2147483648
        %v2049 = vxor.u32 %v2019, 2147483648
        %v2050 = vxor.u32 %v2022, 2147483648
        %v2051 = vxor.u32 %v2025, 2147483648
        %v2052 = vxor.u32 %v2028, 2147483648
        %v2053 = vxor.u32 %v2031, 2147483648
        %v2054 = vxor.u32 %v2034, 2147483648
        %v2055 = vxor.u32 %v2037, 2147483648
        %v2056 = vmul.f32 %v2040, 1.442695
        %v2057 = vpow.pop %v2056
        %v2058 = vmul.f32 %v2041, 1.442695
        %v2059 = vpow.pop %v2058
        %v2060 = vmul.f32 %v2042, 1.442695
        %v2061 = vpow.pop %v2060
        %v2062 = vmul.f32 %v2043, 1.442695
        %v2063 = vpow.pop %v2062
        %v2064 = vmul.f32 %v2044, 1.442695
        %v2065 = vpow.pop %v2064
        %v2066 = vmul.f32 %v2045, 1.442695
        %v2067 = vpow.pop %v2066
        %v2068 = vmul.f32 %v2046, 1.442695
        %v2069 = vpow.pop %v2068
        %v2070 = vmul.f32 %v2047, 1.442695
        %v2071 = vpow.pop %v2070
        %v2072 = vmul.f32 %v2048, 1.442695
        %v2073 = vpow.pop %v2072
        %v2074 = vmul.f32 %v2049, 1.442695
        %v2075 = vpow.pop %v2074
        %v2076 = vmul.f32 %v2050, 1.442695
        %v2077 = vpow.pop %v2076
        %v2078 = vmul.f32 %v2051, 1.442695
        %v2079 = vpow.pop %v2078
        %v2080 = vmul.f32 %v2052, 1.442695
        %v2081 = vpow.pop %v2080
        %v2082 = vmul.f32 %v2053, 1.442695
        %v2083 = vpow.pop %v2082
        %v2084 = vmul.f32 %v2054, 1.442695
        %v2085 = vpow.pop %v2084
        %v2086 = vmul.f32 %v2055, 1.442695
        %v2087 = vpow.pop %v2086
        %v2088 = vadd.f32 %v2057, 1.0
        %v2089 = vadd.f32 %v2059, 1.0
        %v2090 = vadd.f32 %v2061, 1.0
        %v2091 = vadd.f32 %v2063, 1.0
        %v2092 = vadd.f32 %v2065, 1.0
        %v2093 = vadd.f32 %v2067, 1.0
        %v2094 = vadd.f32 %v2069, 1.0
        %v2095 = vadd.f32 %v2071, 1.0
        %v2096 = vadd.f32 %v2073, 1.0
        %v2097 = vadd.f32 %v2075, 1.0
        %v2098 = vadd.f32 %v2077, 1.0
        %v2099 = vadd.f32 %v2079, 1.0
        %v2100 = vadd.f32 %v2081, 1.0
        %v2101 = vadd.f32 %v2083, 1.0
        %v2102 = vadd.f32 %v2085, 1.0
        %v2103 = vadd.f32 %v2087, 1.0
        %v2104 = vrcp.pop %v2088
        %v2105 = vmul.f32 1.0, %v2104
        %v2106 = vrcp.pop %v2089
        %v2107 = vmul.f32 1.0, %v2106
        %v2108 = vrcp.pop %v2090
        %v2109 = vmul.f32 1.0, %v2108
        %v2110 = vrcp.pop %v2091
        %v2111 = vmul.f32 1.0, %v2110
        %v2112 = vrcp.pop %v2092
        %v2113 = vmul.f32 1.0, %v2112
        %v2114 = vrcp.pop %v2093
        %v2115 = vmul.f32 1.0, %v2114
        %v2116 = vrcp.pop %v2094
        %v2117 = vmul.f32 1.0, %v2116
        %v2118 = vrcp.pop %v2095
        %v2119 = vmul.f32 1.0, %v2118
        %v2120 = vrcp.pop %v2096
        %v2121 = vmul.f32 1.0, %v2120
        %v2122 = vrcp.pop %v2097
        %v2123 = vmul.f32 1.0, %v2122
        %v2124 = vrcp.pop %v2098
        %v2125 = vmul.f32 1.0, %v2124
        %v2126 = vrcp.pop %v2099
        %v2127 = vmul.f32 1.0, %v2126
        %v2128 = vrcp.pop %v2100
        %v2129 = vmul.f32 1.0, %v2128
        %v2130 = vrcp.pop %v2101
        %v2131 = vmul.f32 1.0, %v2130
        %v2132 = vrcp.pop %v2102
        %v2133 = vmul.f32 1.0, %v2132
        %v2134 = vrcp.pop %v2103
        %v2135 = vmul.f32 1.0, %v2134
        %v2136 = vxor.u32 %v1993, 2147483648
        %v2137 = vxor.u32 %v1996, 2147483648
        %v2138 = vxor.u32 %v1999, 2147483648
        %v2139 = vxor.u32 %v2002, 2147483648
        %v2140 = vxor.u32 %v2005, 2147483648
        %v2141 = vxor.u32 %v2008, 2147483648
        %v2142 = vxor.u32 %v2011, 2147483648
        %v2143 = vxor.u32 %v2014, 2147483648
        %v2144 = vxor.u32 %v2017, 2147483648
        %v2145 = vxor.u32 %v2020, 2147483648
        %v2146 = vxor.u32 %v2023, 2147483648
        %v2147 = vxor.u32 %v2026, 2147483648
        %v2148 = vxor.u32 %v2029, 2147483648
        %v2149 = vxor.u32 %v2032, 2147483648
        %v2150 = vxor.u32 %v2035, 2147483648
        %v2151 = vxor.u32 %v2038, 2147483648
        %v2152 = vmul.f32 %v2136, 1.442695
        %v2153 = vpow.pop %v2152
        %v2154 = vmul.f32 %v2137, 1.442695
        %v2155 = vpow.pop %v2154
        %v2156 = vmul.f32 %v2138, 1.442695
        %v2157 = vpow.pop %v2156
        %v2158 = vmul.f32 %v2139, 1.442695
        %v2159 = vpow.pop %v2158
        %v2160 = vmul.f32 %v2140, 1.442695
        %v2161 = vpow.pop %v2160
        %v2162 = vmul.f32 %v2141, 1.442695
        %v2163 = vpow.pop %v2162
        %v2164 = vmul.f32 %v2142, 1.442695
        %v2165 = vpow.pop %v2164
        %v2166 = vmul.f32 %v2143, 1.442695
        %v2167 = vpow.pop %v2166
        %v2168 = vmul.f32 %v2144, 1.442695
        %v2169 = vpow.pop %v2168
        %v2170 = vmul.f32 %v2145, 1.442695
        %v2171 = vpow.pop %v2170
        %v2172 = vmul.f32 %v2146, 1.442695
        %v2173 = vpow.pop %v2172
        %v2174 = vmul.f32 %v2147, 1.442695
        %v2175 = vpow.pop %v2174
        %v2176 = vmul.f32 %v2148, 1.442695
        %v2177 = vpow.pop %v2176
        %v2178 = vmul.f32 %v2149, 1.442695
        %v2179 = vpow.pop %v2178
        %v2180 = vmul.f32 %v2150, 1.442695
        %v2181 = vpow.pop %v2180
        %v2182 = vmul.f32 %v2151, 1.442695
        %v2183 = vpow.pop %v2182
        %v2184 = vadd.f32 %v2153, 1.0
        %v2185 = vadd.f32 %v2155, 1.0
        %v2186 = vadd.f32 %v2157, 1.0
        %v2187 = vadd.f32 %v2159, 1.0
        %v2188 = vadd.f32 %v2161, 1.0
        %v2189 = vadd.f32 %v2163, 1.0
        %v2190 = vadd.f32 %v2165, 1.0
        %v2191 = vadd.f32 %v2167, 1.0
        %v2192 = vadd.f32 %v2169, 1.0
        %v2193 = vadd.f32 %v2171, 1.0
        %v2194 = vadd.f32 %v2173, 1.0
        %v2195 = vadd.f32 %v2175, 1.0
        %v2196 = vadd.f32 %v2177, 1.0
        %v2197 = vadd.f32 %v2179, 1.0
        %v2198 = vadd.f32 %v2181, 1.0
        %v2199 = vadd.f32 %v2183, 1.0
        %v2200 = vrcp.pop %v2184
        %v2201 = vmul.f32 1.0, %v2200
        %v2202 = vrcp.pop %v2185
        %v2203 = vmul.f32 1.0, %v2202
        %v2204 = vrcp.pop %v2186
        %v2205 = vmul.f32 1.0, %v2204
        %v2206 = vrcp.pop %v2187
        %v2207 = vmul.f32 1.0, %v2206
        %v2208 = vrcp.pop %v2188
        %v2209 = vmul.f32 1.0, %v2208
        %v2210 = vrcp.pop %v2189
        %v2211 = vmul.f32 1.0, %v2210
        %v2212 = vrcp.pop %v2190
        %v2213 = vmul.f32 1.0, %v2212
        %v2214 = vrcp.pop %v2191
        %v2215 = vmul.f32 1.0, %v2214
        %v2216 = vrcp.pop %v2192
        %v2217 = vmul.f32 1.0, %v2216
        %v2218 = vrcp.pop %v2193
        %v2219 = vmul.f32 1.0, %v2218
        %v2220 = vrcp.pop %v2194
        %v2221 = vmul.f32 1.0, %v2220
        %v2222 = vrcp.pop %v2195
        %v2223 = vmul.f32 1.0, %v2222
        %v2224 = vrcp.pop %v2196
        %v2225 = vmul.f32 1.0, %v2224
        %v2226 = vrcp.pop %v2197
        %v2227 = vmul.f32 1.0, %v2226
        %v2228 = vrcp.pop %v2198
        %v2229 = vmul.f32 1.0, %v2228
        %v2230 = vrcp.pop %v2199
        %v2231 = vmul.f32 1.0, %v2230
        %v2232 = vtanh.pop %v1994
        %v2233 = vtanh.pop %v1997
        %v2234 = vtanh.pop %v2000
        %v2235 = vtanh.pop %v2003
        %v2236 = vtanh.pop %v2006
        %v2237 = vtanh.pop %v2009
        %v2238 = vtanh.pop %v2012
        %v2239 = vtanh.pop %v2015
        %v2240 = vtanh.pop %v2018
        %v2241 = vtanh.pop %v2021
        %v2242 = vtanh.pop %v2024
        %v2243 = vtanh.pop %v2027
        %v2244 = vtanh.pop %v2030
        %v2245 = vtanh.pop %v2033
        %v2246 = vtanh.pop %v2036
        %v2247 = vtanh.pop %v2039
        %v2248 = vmul.f32 %v2105, %v2232
        %v2249 = vmul.f32 %v2107, %v2233
        %v2250 = vmul.f32 %v2109, %v2234
        %v2251 = vmul.f32 %v2111, %v2235
        %v2252 = vmul.f32 %v2113, %v2236
        %v2253 = vmul.f32 %v2115, %v2237
        %v2254 = vmul.f32 %v2117, %v2238
        %v2255 = vmul.f32 %v2119, %v2239
        %v2256 = vmul.f32 %v2121, %v2240
        %v2257 = vmul.f32 %v2123, %v2241
        %v2258 = vmul.f32 %v2125, %v2242
        %v2259 = vmul.f32 %v2127, %v2243
        %v2260 = vmul.f32 %v2129, %v2244
        %v2261 = vmul.f32 %v2131, %v2245
        %v2262 = vmul.f32 %v2133, %v2246
        %v2263 = vmul.f32 %v2135, %v2247
        %v2264 = vadd.f32 %v2248, %v1550
        %v2265 = vadd.f32 %v2249, %v1551
        %v2266 = vadd.f32 %v2250, %v1552
        %v2267 = vadd.f32 %v2251, %v1553
        %v2268 = vadd.f32 %v2252, %v1554
        %v2269 = vadd.f32 %v2253, %v1555
        %v2270 = vadd.f32 %v2254, %v1556
        %v2271 = vadd.f32 %v2255, %v1557
        %v2272 = vadd.f32 %v2256, %v1558
        %v2273 = vadd.f32 %v2257, %v1559
        %v2274 = vadd.f32 %v2258, %v1560
        %v2275 = vadd.f32 %v2259, %v1561
        %v2276 = vadd.f32 %v2260, %v1562
        %v2277 = vadd.f32 %v2261, %v1563
        %v2278 = vadd.f32 %v2262, %v1564
        %v2279 = vadd.f32 %v2263, %v1565
        %v2280 = vtanh.pop %v2264
        %v2281 = vtanh.pop %v2265
        %v2282 = vtanh.pop %v2266
        %v2283 = vtanh.pop %v2267
        %v2284 = vtanh.pop %v2268
        %v2285 = vtanh.pop %v2269
        %v2286 = vtanh.pop %v2270
        %v2287 = vtanh.pop %v2271
        %v2288 = vtanh.pop %v2272
        %v2289 = vtanh.pop %v2273
        %v2290 = vtanh.pop %v2274
        %v2291 = vtanh.pop %v2275
        %v2292 = vtanh.pop %v2276
        %v2293 = vtanh.pop %v2277
        %v2294 = vtanh.pop %v2278
        %v2295 = vtanh.pop %v2279
        %v2296 = vmul.f32 %v2201, %v2280
        %v2297 = vmul.f32 %v2203, %v2281
        %v2298 = vmul.f32 %v2205, %v2282
        %v2299 = vmul.f32 %v2207, %v2283
        %v2300 = vmul.f32 %v2209, %v2284
        %v2301 = vmul.f32 %v2211, %v2285
        %v2302 = vmul.f32 %v2213, %v2286
        %v2303 = vmul.f32 %v2215, %v2287
        %v2304 = vmul.f32 %v2217, %v2288
        %v2305 = vmul.f32 %v2219, %v2289
        %v2306 = vmul.f32 %v2221, %v2290
        %v2307 = vmul.f32 %v2223, %v2291
        %v2308 = vmul.f32 %v2225, %v2292
        %v2309 = vmul.f32 %v2227, %v2293
        %v2310 = vmul.f32 %v2229, %v2294
        %v2311 = vmul.f32 %v2231, %v2295
        %2312 = vst [vmem:[%s239] sm:$0xff] %v2296
        %2313 = vst [vmem:[%s239 + $0x10] sm:$0xff] %v2297
        %2314 = vst [vmem:[%s239 + $0x20] sm:$0xff] %v2298
        %2315 = vst [vmem:[%s239 + $0x30] sm:$0xff] %v2299
        %2316 = vst [vmem:[%s239 + $0x40] sm:$0xff] %v2300
        %2317 = vst [vmem:[%s239 + $0x50] sm:$0xff] %v2301
        %2318 = vst [vmem:[%s239 + $0x60] sm:$0xff] %v2302
        %2319 = vst [vmem:[%s239 + $0x70] sm:$0xff] %v2303
        %2320 = vst [vmem:[%s239 + $0x80] sm:$0xff] %v2304
        %2321 = vst [vmem:[%s239 + $0x90] sm:$0xff] %v2305
        %2322 = vst [vmem:[%s239 + $0xa0] sm:$0xff] %v2306
        %2323 = vst [vmem:[%s239 + $0xb0] sm:$0xff] %v2307
        %2324 = vst [vmem:[%s239 + $0xc0] sm:$0xff] %v2308
        %2325 = vst [vmem:[%s239 + $0xd0] sm:$0xff] %v2309
        %2326 = vst [vmem:[%s239 + $0xe0] sm:$0xff] %v2310
        %2327 = vst [vmem:[%s239 + $0xf0] sm:$0xff] %v2311
        %2328 = vst [vmem:[%s239 + $0x8] sm:$0xff] %v2264
        %2329 = vst [vmem:[%s239 + $0x18] sm:$0xff] %v2265
        %2330 = vst [vmem:[%s239 + $0x28] sm:$0xff] %v2266
        %2331 = vst [vmem:[%s239 + $0x38] sm:$0xff] %v2267
        %2332 = vst [vmem:[%s239 + $0x48] sm:$0xff] %v2268
        %2333 = vst [vmem:[%s239 + $0x58] sm:$0xff] %v2269
        %2334 = vst [vmem:[%s239 + $0x68] sm:$0xff] %v2270
        %2335 = vst [vmem:[%s239 + $0x78] sm:$0xff] %v2271
        %2336 = vst [vmem:[%s239 + $0x88] sm:$0xff] %v2272
        %2337 = vst [vmem:[%s239 + $0x98] sm:$0xff] %v2273
        %2338 = vst [vmem:[%s239 + $0xa8] sm:$0xff] %v2274
        %2339 = vst [vmem:[%s239 + $0xb8] sm:$0xff] %v2275
        %2340 = vst [vmem:[%s239 + $0xc8] sm:$0xff] %v2276
        %2341 = vst [vmem:[%s239 + $0xd8] sm:$0xff] %v2277
        %2342 = vst [vmem:[%s239 + $0xe8] sm:$0xff] %v2278
        %2343 = vst [vmem:[%s239 + $0xf8] sm:$0xff] %v2279
        %v2344 = vpack.c.bf16 %v2297, %v2296
        %v2345 = vpack.c.bf16 %v2299, %v2298
        %v2346 = vpack.c.bf16 %v2301, %v2300
        %v2347 = vpack.c.bf16 %v2303, %v2302
        %v2348 = vpack.c.bf16 %v2305, %v2304
        %v2349 = vpack.c.bf16 %v2307, %v2306
        %v2350 = vpack.c.bf16 %v2309, %v2308
        %v2351 = vpack.c.bf16 %v2311, %v2310
        %2352 = vst [vmem:[#allocation2] sm:$0xff] %v2344
        %2353 = vst [vmem:[#allocation2 + $0x8] sm:$0xff] %v2345
        %2354 = vst [vmem:[#allocation2 + $0x10] sm:$0xff] %v2346
        %2355 = vst [vmem:[#allocation2 + $0x18] sm:$0xff] %v2347
        %2356 = vst [vmem:[#allocation2 + $0x20] sm:$0xff] %v2348
        %2357 = vst [vmem:[#allocation2 + $0x28] sm:$0xff] %v2349
        %2358 = vst [vmem:[#allocation2 + $0x30] sm:$0xff] %v2350
        %2359 = vst [vmem:[#allocation2 + $0x38] sm:$0xff] %v2351
        %2360 = vst [vmem:[#allocation3] sm:$0xff] %v2264
        %2361 = vst [vmem:[#allocation3 + $0x8] sm:$0xff] %v2265
        %2362 = vst [vmem:[#allocation3 + $0x10] sm:$0xff] %v2266
        %2363 = vst [vmem:[#allocation3 + $0x18] sm:$0xff] %v2267
        %2364 = vst [vmem:[#allocation3 + $0x20] sm:$0xff] %v2268
        %2365 = vst [vmem:[#allocation3 + $0x28] sm:$0xff] %v2269
        %2366 = vst [vmem:[#allocation3 + $0x30] sm:$0xff] %v2270
        %2367 = vst [vmem:[#allocation3 + $0x38] sm:$0xff] %v2271
        %2368 = vst [vmem:[#allocation3 + $0x40] sm:$0xff] %v2272
        %2369 = vst [vmem:[#allocation3 + $0x48] sm:$0xff] %v2273
        %2370 = vst [vmem:[#allocation3 + $0x50] sm:$0xff] %v2274
        %2371 = vst [vmem:[#allocation3 + $0x58] sm:$0xff] %v2275
        %2372 = vst [vmem:[#allocation3 + $0x60] sm:$0xff] %v2276
        %2373 = vst [vmem:[#allocation3 + $0x68] sm:$0xff] %v2277
        %2374 = vst [vmem:[#allocation3 + $0x70] sm:$0xff] %v2278
        %2375 = vst [vmem:[#allocation3 + $0x78] sm:$0xff] %v2279
        %s2376 = sand.u32 %s138, 1
        %s2377 = scalar_lea.sflag [#allocation5], %s2376
        %s2378 = sand.u32 %s138, 1
        %s2379 = smul.addr %s2378, 256
        %s2380 = scalar_lea.vmem [#allocation4], %s2379
        // Predicated region
        $region41: #{_forward_stacked.1} parent=35 // pred_check
          %p2381 = pneg %p148
        $region42: #{_forward_stacked.1} parent=35 // pred_check_branch
          %2383 = sbr.rel (%p2381) target = $region44
        $region43: #{_forward_stacked.1} parent=35 // pred_region
          %s2385 = ssub.s32 4096, 4096
          %2386 = vsyncadd %s2377, %s2385
          %s2387 = smul.addr %s22, 32
          %s2388 = smul.addr %s23, 64
          %s2389 = sadd.s32 %s2387, %s2388
          %s2390 = smul.addr %s2389, 128
          %s2391 = scalar_lea.hbm %s4, %s2390
          %s2392 = sshll.u32 %s2380, 4
          %s2393 = int_to_ptr.vmem [resolvable:$true] %s2392
          %2398 = dma.vmem_to_hbm [thread:$0]  %s2393, 4096, %s2391, %s2377, 256, 256, 16
        $region44: #{_forward_stacked.1} parent=35 // pred_fallthru
          _
      $region36: #{_forward_stacked.1} parent=5 // pred_fallthru
        _
      %p2399 = scmp.le.s32.totalorder 2, %s13
      // Predicated region
      $region45: #{_forward_stacked.1} parent=5 // pred_check
        %p2400 = pneg %p2399
      $region46: #{_forward_stacked.1} parent=5 // pred_check_branch
        %2402 = sbr.rel (%p2400) target = $region48
      $region47: #{_forward_stacked.1} parent=5 // pred_region
        %s2403 = ssub.s32 %s13, 2
        // Predicated region
        $region49: #{_forward_stacked.1} parent=47 // pred_check
          %p2404 = pneg %p154
        $region50: #{_forward_stacked.1} parent=47 // pred_check_branch
          %2406 = sbr.rel (%p2404) target = $region52
        $region51: #{_forward_stacked.1} parent=47 // pred_region
          %s2407 = sand.u32 %s139, 1
          %s2408 = scalar_lea.sflag [#allocation5], %s2407
          %s2409 = sand.u32 %s139, 1
          %s2410 = smul.addr %s2409, 256
          %s2411 = scalar_lea.vmem [#allocation4], %s2410
          %2412 = dma.done %s2408, 4096
        $region52: #{_forward_stacked.1} parent=47 // pred_fallthru
          _
      $region48: #{_forward_stacked.1} parent=5 // pred_fallthru
        _
    $region6: #{_forward_stacked.1} parent=1 // loop_footer
      %s17 = sadd.s32 1, %s13
    $region7: #{_forward_stacked.1} parent=1 // loop_footer_branch
      %12 = sbr.rel target = $region3
    $region8: #{_forward_stacked.1} parent=1 // loop_exit
      _
    %2413 = vsyncpa [#allocation5], 1
    %s2414 = scalar_lea.sflag [#allocation5], 1
    %2415 = vsyncpa %s2414, 1

</llo_original>
